<compile_context>
chip_gen: v7x
topology: tpu7x:2x2x1
jax: 0.10.0
libtpu: 0.0.40
codegen_flags: <defaults>
</compile_context>

<pallas_src>
import math
import functools
import numpy as np
import jax
import jax.numpy as jnp
from jax.experimental import pallas as pl
from jax.experimental.pallas import tpu as pltpu

_NEG_INF = -1e30  # finite large-negative fill (safe masked_fill; avoids inf-inf NaN)


# ---------------------------------------------------------------------------
# Host-side construction of the LocalLog mask (exact port of LocalLogMask)
# ---------------------------------------------------------------------------
def _row_mask(index, L):
    local_window_size = math.ceil(np.log2(L) / 2)
    mask = np.zeros(L, dtype=np.float32)
    if index - local_window_size + 1 < 0:
        mask[:index] = 1
    else:
        mask[index - local_window_size + 1:index + 1] = 1
        for i in range(0, math.ceil(10 * np.log2(L))):
            new_index = index - local_window_size + 1 - int(1.5 ** i)
            if new_index >= 0:
                mask[new_index] = 1
            else:
                break
    if index + local_window_size - 1 >= L:
        mask[index:] = 1
    else:
        mask[index:index + local_window_size] = 1
        for i in range(0, math.ceil(10 * np.log2(L))):
            new_index = index + local_window_size - 1 + int(1.5 ** i)
            if new_index < L:
                mask[new_index] = 1
            else:
                break
    return mask


def _make_locallog_mask_np(L):
    """bool [L, L]; True where the score must be masked (filled with -inf)."""
    m = np.zeros((L, L), dtype=np.float32)
    for i in range(L):
        m[i] = _row_mask(i, L)
    return m == 0


# ---------------------------------------------------------------------------
# Static (host-side) tiling helpers
# ---------------------------------------------------------------------------
def _pick_block(L, candidates):
    """Largest candidate (multiple of 128) that divides L, else full L (untiled fallback)."""
    for c in candidates:
        if L >= c and L % c == 0:
            return c
    return L


def _build_block_schedule(mask_np, block_q, block_k):
    """Per q-block list of KV-block indices that contain >=1 live key, padded by repeating
    the last live index (repeat => no extra DMA; padded steps are skipped with pl.when)."""
    L = mask_np.shape[0]
    n_q, n_k = L // block_q, L // block_k
    live = np.zeros((n_q, n_k), dtype=bool)
    for qi in range(n_q):
        for ki in range(n_k):
            blk = mask_np[qi * block_q:(qi + 1) * block_q,
                          ki * block_k:(ki + 1) * block_k]
            live[qi, ki] = not blk.all()
    counts = live.sum(axis=1).astype(np.int32)
    max_steps = max(int(counts.max()), 1)
    table = np.zeros((n_q, max_steps), dtype=np.int32)
    for qi in range(n_q):
        idx = np.nonzero(live[qi])[0].astype(np.int32)
        if len(idx) == 0:          # cannot happen for LocalLog (diagonal always live)
            continue
        table[qi, :len(idx)] = idx
        if len(idx) < max_steps:
            table[qi, len(idx):] = idx[-1]
    return table, counts, max_steps


# ---------------------------------------------------------------------------
# Pallas kernel: flash-style, head-packed lane-dense blocks, per-head lane slices
# ---------------------------------------------------------------------------
def _flash_locallog_kernel(scale, H, E, D,
                           kv_tbl_ref, kv_cnt_ref,            # scalar prefetch (SMEM)
                           q_ref, k_ref, v_ref, msk_ref,      # VMEM input blocks
                           o_ref,                             # VMEM output block
                           m_sc, l_sc, acc_sc):               # VMEM scratch
    qi = pl.program_id(1)
    j = pl.program_id(2)

    @pl.when(j == 0)
    def _init():
        m_sc[...] = jnp.full(m_sc.shape, _NEG_INF, dtype=m_sc.dtype)
        l_sc[...] = jnp.zeros(l_sc.shape, dtype=l_sc.dtype)
        acc_sc[...] = jnp.zeros(acc_sc.shape, dtype=acc_sc.dtype)

    # Skip padded schedule steps (only live KV blocks contribute).
    @pl.when(j < kv_cnt_ref[qi])
    def _compute():
        q = q_ref[...] * scale            # (bq, H*E) native dtype; scale folded into q
        k = k_ref[...]                    # (bk, H*E)
        v = v_ref[...]                    # (bk, H*D)
        # int8 mask -> additive f32 bias built in-kernel (0 / -1e30), shared across heads.
        bias = msk_ref[...].astype(jnp.float32) * _NEG_INF      # (bq, bk)

        m_prev = m_sc[...]                # (bq, H)
        l_prev = l_sc[...]                # (bq, H)
        acc_prev = acc_sc[...]            # (bq, H*D)

        m_parts, l_parts, acc_parts = [], [], []
        for h in range(H):                               # unrolled: H is small & static
            q_h = q[:, h * E:(h + 1) * E]                # (bq, E) static lane slice
            k_h = k[:, h * E:(h + 1) * E]                # (bk, E)
            v_h = v[:, h * D:(h + 1) * D]                # (bk, D)

            s = jnp.einsum('qe,ke->qk', q_h, k_h,
                           preferred_element_type=jnp.float32) + bias

            m_p = m_prev[:, h:h + 1]
            m_n = jnp.maximum(m_p, jnp.max(s, axis=-1, keepdims=True))
            alpha = jnp.exp(m_p - m_n)
            p = jnp.exp(s - m_n)

            l_parts.append(alpha * l_prev[:, h:h + 1]
                           + jnp.sum(p, axis=-1, keepdims=True))
            pv = jnp.einsum('qk,kd->qd', p.astype(v.dtype), v_h,
                            preferred_element_type=jnp.float32)
            acc_parts.append(alpha * acc_prev[:, h * D:(h + 1) * D] + pv)
            m_parts.append(m_n)

        m_sc[...] = jnp.concatenate(m_parts, axis=1)
        l_sc[...] = jnp.concatenate(l_parts, axis=1)
        acc_sc[...] = jnp.concatenate(acc_parts, axis=1)

    @pl.when(j == pl.num_programs(2) - 1)
    def _finalize():
        acc = acc_sc[...]                 # (bq, H*D)
        l = l_sc[...]                     # (bq, H)
        inv = pl.reciprocal(l, approx=True)     # EUP vrcp (free slot)
        inv = inv * (2.0 - l * inv)             # one Newton step -> ~f32 accuracy
        outs = [acc[:, h * D:(h + 1) * D] * inv[:, h:h + 1] for h in range(H)]
        o_ref[...] = jnp.concatenate(outs, axis=1).astype(o_ref.dtype)  # lane-dense store


# ---------------------------------------------------------------------------
# Wrapper
# ---------------------------------------------------------------------------
def locallog_attention(queries, keys, values, mask_flag=True,
                       block_q=None, block_k=None):
    """queries/keys: [B, L, H, E], values: [B, L, H, D] -> ([B, L, H, D], None)."""
    B, L, H, E = queries.shape
    D = values.shape[-1]
    out_dtype = queries.dtype
    scale = 1.0 / math.sqrt(E)

    bq = block_q if block_q is not None else _pick_block(L, (512, 256, 128))
    bk = block_k if block_k is not None else _pick_block(L, (128,))
    assert L % bq == 0 and L % bk == 0, "block sizes must divide L"
    n_q = L // bq

    # Static host-side mask -> int8 mask tensor + block-sparse KV schedule.
    if mask_flag:
        mask_np = _make_locallog_mask_np(L)
    else:
        mask_np = np.zeros((L, L), dtype=bool)
    mask_i8 = jnp.asarray(mask_np.astype(np.int8))         # (L, L) int8 (1 = masked)
    tbl_np, cnt_np, max_steps = _build_block_schedule(mask_np, bq, bk)
    kv_table = jnp.asarray(tbl_np)                          # (n_q, max_steps) int32
    kv_count = jnp.asarray(cnt_np)                          # (n_q,)           int32

    # Native contiguous layout, heads packed into lanes (free reshapes, no HBM transposes).
    q = queries.reshape(B, L, H * E)
    k = keys.reshape(B, L, H * E)
    v = values.reshape(B, L, H * D)

    q_spec = pl.BlockSpec((None, bq, H * E),
                          lambda b, qi, j, tbl, cnt: (b, qi, 0))
    k_spec = pl.BlockSpec((None, bk, H * E),
                          lambda b, qi, j, tbl, cnt: (b, tbl[qi, j], 0))
    v_spec = pl.BlockSpec((None, bk, H * D),
                          lambda b, qi, j, tbl, cnt: (b, tbl[qi, j], 0))
    m_spec = pl.BlockSpec((bq, bk),
                          lambda b, qi, j, tbl, cnt: (qi, tbl[qi, j]))
    o_spec = pl.BlockSpec((None, bq, H * D),
                          lambda b, qi, j, tbl, cnt: (b, qi, 0))

    # Advisory cost estimate: count only the live (non-skipped) KV blocks.
    live = int(cnt_np.sum())
    itemsize = np.dtype(queries.dtype).itemsize
    cost = pl.CostEstimate(
        flops=int(2 * B * H * live * bq * bk * (E + D)),
        transcendentals=int(B * H * live * bq * bk),
        bytes_accessed=int(B * L * H * E * itemsize                    # q
                           + B * live * bk * H * (E + D) * itemsize    # live K + V blocks
                           + B * live * bq * bk                        # int8 mask blocks
                           + B * L * H * D * itemsize))                # output

    out_packed = pl.pallas_call(
        functools.partial(_flash_locallog_kernel, scale, H, E, D),
        out_shape=jax.ShapeDtypeStruct((B, L, H * D), out_dtype),
        grid_spec=pltpu.PrefetchScalarGridSpec(
            num_scalar_prefetch=2,
            grid=(B, n_q, max_steps),
            in_specs=[q_spec, k_spec, v_spec, m_spec],
            out_specs=o_spec,
            scratch_shapes=[
                pltpu.VMEM((bq, H), jnp.float32),        # m_i (per head)
                pltpu.VMEM((bq, H), jnp.float32),        # l_i (per head)
                pltpu.VMEM((bq, H * D), jnp.float32),    # acc (lane-dense)
            ]),
        compiler_params=pltpu.CompilerParams(
            dimension_semantics=("parallel", "parallel", "arbitrary"),
            vmem_limit_bytes=48 * 1024 * 1024),
        cost_estimate=cost,
    )(kv_table, kv_count, q, k, v, mask_i8)

    attn_values = out_packed.reshape(B, L, H, D)   # free reshape back to [B, L, H, D]
    return attn_values, None


# ---------------------------------------------------------------------------
# Pure-JAX reference (matches the PyTorch forward, eval mode)
# ---------------------------------------------------------------------------
def _reference(queries, keys, values, mask_flag=True):
    B, L, H, E = queries.shape
    scale = 1.0 / math.sqrt(E)
    q = jnp.transpose(queries, (0, 2, 1, 3)).astype(jnp.float32)
    k = jnp.transpose(keys, (0, 2, 3, 1)).astype(jnp.float32)
    s = jnp.matmul(q, k) * scale
    if mask_flag:
        mask = jnp.asarray(_make_locallog_mask_np(L))[None, None]   # (1,1,L,L)
        s = jnp.where(mask, -jnp.inf, s)
    p = jax.nn.softmax(s, axis=-1)
    v = jnp.transpose(values, (0, 2, 1, 3)).astype(jnp.float32)
    out = jnp.matmul(p, v)
    return jnp.transpose(out, (0, 2, 1, 3)).astype(queries.dtype)


if __name__ == "__main__":
    key = jax.random.PRNGKey(0)

    # --- small shapes matching the module conventions ---
    B, L, H, E, D = 2, 8, 4, 32, 32
    kq, kk, kv = jax.random.split(key, 3)
    queries = jax.random.normal(kq, (B, L, H, E), dtype=jnp.float32)
    keys = jax.random.normal(kk, (B, L, H, E), dtype=jnp.float32)
    values = jax.random.normal(kv, (B, L, H, D), dtype=jnp.float32)

    out, attn = locallog_attention(queries, keys, values, mask_flag=True)
    out = jax.block_until_ready(out)
    assert out.shape == (B, L, H, D) and attn is None
    ref = _reference(queries, keys, values, mask_flag=True)
    np.testing.assert_allclose(np.asarray(out), np.asarray(ref), atol=2e-5, rtol=2e-5)

    # --- tiled path: decoupled bq=256 / bk=128, multi KV-step online softmax ---
    B2, L2 = 2, 256
    k2q, k2k, k2v = jax.random.split(jax.random.PRNGKey(1), 3)
    q2 = jax.random.normal(k2q, (B2, L2, H, E), dtype=jnp.float32)
    k2 = jax.random.normal(k2k, (B2, L2, H, E), dtype=jnp.float32)
    v2 = jax.random.normal(k2v, (B2, L2, H, D), dtype=jnp.float32)
    out2, _ = locallog_attention(q2, k2, v2, mask_flag=True)
    out2 = jax.block_until_ready(out2)
    ref2 = _reference(q2, k2, v2, mask_flag=True)
    np.testing.assert_allclose(np.asarray(out2), np.asarray(ref2), atol=2e-5, rtol=2e-5)

    # --- multiple q-blocks (per-q-block init/finalize + block-sparse KV skipping) ---
    out3, _ = locallog_attention(q2, k2, v2, mask_flag=True, block_q=128, block_k=128)
    out3 = jax.block_until_ready(out3)
    np.testing.assert_allclose(np.asarray(out3), np.asarray(ref2), atol=2e-5, rtol=2e-5)

    print("KERNEL_OK")
</pallas_src>

<mosaic_0001>
module attributes {stable_mosaic.version = 11 : i64} {
  func.func @_flash_locallog_kernel(%arg0: i32, %arg1: i32, %arg2: i32, %arg3: memref<1x1xi32, #tpu.memory_space<smem>>, %arg4: memref<1xi32, #tpu.memory_space<smem>>, %arg5: memref<1x8x128xf32, #tpu.memory_space<vmem>>, %arg6: memref<1x8x128xf32, #tpu.memory_space<vmem>>, %arg7: memref<1x8x128xf32, #tpu.memory_space<vmem>>, %arg8: memref<8x8xi8, #tpu.memory_space<vmem>>, %arg9: memref<1x8x128xf32, #tpu.memory_space<vmem>>, %arg10: memref<8x4xf32, #tpu.memory_space<vmem>>, %arg11: memref<8x4xf32, #tpu.memory_space<vmem>>, %arg12: memref<8x128xf32, #tpu.memory_space<vmem>>) attributes {dimension_semantics = [#tpu.dimension_semantics<parallel>, #tpu.dimension_semantics<parallel>, #tpu.dimension_semantics<arbitrary>], iteration_bounds = array<i64: 2, 1, 1>, scalar_prefetch = 2 : i64, scratch_operands = 3 : i64, tpu.core_type = #tpu.core_type<tc>, window_params = [{transform_indices = @transform_0, window_bounds = array<i64: 1, 8, 128>}, {transform_indices = @transform_1, window_bounds = array<i64: 1, 8, 128>}, {transform_indices = @transform_2, window_bounds = array<i64: 1, 8, 128>}, {transform_indices = @transform_3, window_bounds = array<i64: 8, 8>}, {transform_indices = @transform_4, window_bounds = array<i64: 1, 8, 128>}]} {
    %c0_i32 = arith.constant 0 : i32
    %0 = arith.cmpi eq, %arg2, %c0_i32 : i32
    %1 = arith.extui %0 : i1 to i32
    %c0_i32_0 = arith.constant 0 : i32
    %2 = arith.cmpi ne, %1, %c0_i32_0 : i32
    scf.if %2 {
      %cst = arith.constant -1.000000e+30 : f32
      %11 = vector.broadcast %cst : f32 to vector<8x4xf32>
      %c0 = arith.constant 0 : index
      %c0_4 = arith.constant 0 : index
      %12 = vector.load %arg10[%c0, %c0_4] : memref<8x4xf32, #tpu.memory_space<vmem>>, vector<8x4xf32>
      tpu.vector_store %arg10[%c0, %c0_4], %11 {strides = array<i32>} : memref<8x4xf32, #tpu.memory_space<vmem>>, vector<8x4xf32>,
      %cst_5 = arith.constant 0.000000e+00 : f32
      %13 = vector.broadcast %cst_5 : f32 to vector<8x4xf32>
      %c0_6 = arith.constant 0 : index
      %c0_7 = arith.constant 0 : index
      %14 = vector.load %arg11[%c0_6, %c0_7] : memref<8x4xf32, #tpu.memory_space<vmem>>, vector<8x4xf32>
      tpu.vector_store %arg11[%c0_6, %c0_7], %13 {strides = array<i32>} : memref<8x4xf32, #tpu.memory_space<vmem>>, vector<8x4xf32>,
      %cst_8 = arith.constant 0.000000e+00 : f32
      %15 = vector.broadcast %cst_8 : f32 to vector<8x128xf32>
      %c0_9 = arith.constant 0 : index
      %c0_10 = arith.constant 0 : index
      %16 = vector.load %arg12[%c0_9, %c0_10] : memref<8x128xf32, #tpu.memory_space<vmem>>, vector<8x128xf32>
      tpu.vector_store %arg12[%c0_9, %c0_10], %15 {strides = array<i32>} : memref<8x128xf32, #tpu.memory_space<vmem>>, vector<8x128xf32>,
    } else {
    }
    %3 = arith.index_cast %arg1 : i32 to index
    %4 = memref.load %arg4[%3] : memref<1xi32, #tpu.memory_space<smem>>
    %5 = arith.cmpi slt, %arg2, %4 : i32
    %6 = arith.extui %5 : i1 to i32
    %c0_i32_1 = arith.constant 0 : i32
    %7 = arith.cmpi ne, %6, %c0_i32_1 : i32
    scf.if %7 {
      %c0 = arith.constant 0 : index
      %c0_4 = arith.constant 0 : index
      %c0_5 = arith.constant 0 : index
      %11 = vector.load %arg5[%c0, %c0_4, %c0_5] : memref<1x8x128xf32, #tpu.memory_space<vmem>>, vector<1x8x128xf32>
      %12 = vector.shape_cast %11 : vector<1x8x128xf32> to vector<8x128xf32>
      %cst = arith.constant 0.176776692 : f32
      %13 = vector.broadcast %cst : f32 to vector<8x128xf32>
      %14 = arith.mulf %12, %13 : vector<8x128xf32>
      %c0_6 = arith.constant 0 : index
      %c0_7 = arith.constant 0 : index
      %c0_8 = arith.constant 0 : index
      %15 = vector.load %arg6[%c0_6, %c0_7, %c0_8] : memref<1x8x128xf32, #tpu.memory_space<vmem>>, vector<1x8x128xf32>
      %16 = vector.shape_cast %15 : vector<1x8x128xf32> to vector<8x128xf32>
      %c0_9 = arith.constant 0 : index
      %c0_10 = arith.constant 0 : index
      %c0_11 = arith.constant 0 : index
      %17 = vector.load %arg7[%c0_9, %c0_10, %c0_11] : memref<1x8x128xf32, #tpu.memory_space<vmem>>, vector<1x8x128xf32>
      %18 = vector.shape_cast %17 : vector<1x8x128xf32> to vector<8x128xf32>
      %c0_12 = arith.constant 0 : index
      %c0_13 = arith.constant 0 : index
      %19 = vector.load %arg8[%c0_12, %c0_13] : memref<8x8xi8, #tpu.memory_space<vmem>>, vector<8x8xi8>
      %20 = arith.sitofp %19 : vector<8x8xi8> to vector<8x8xf32>
      %cst_14 = arith.constant -1.000000e+30 : f32
      %21 = vector.broadcast %cst_14 : f32 to vector<8x8xf32>
      %22 = arith.mulf %20, %21 : vector<8x8xf32>
      %c0_15 = arith.constant 0 : index
      %c0_16 = arith.constant 0 : index
      %23 = vector.load %arg10[%c0_15, %c0_16] : memref<8x4xf32, #tpu.memory_space<vmem>>, vector<8x4xf32>
      %c0_17 = arith.constant 0 : index
      %c0_18 = arith.constant 0 : index
      %24 = vector.load %arg11[%c0_17, %c0_18] : memref<8x4xf32, #tpu.memory_space<vmem>>, vector<8x4xf32>
      %c0_19 = arith.constant 0 : index
      %c0_20 = arith.constant 0 : index
      %25 = vector.load %arg12[%c0_19, %c0_20] : memref<8x128xf32, #tpu.memory_space<vmem>>, vector<8x128xf32>
      %26 = vector.extract_strided_slice %14 {offsets = [0, 0], sizes = [8, 32], strides = [1, 1]} : vector<8x128xf32> to vector<8x32xf32>
      %27 = vector.extract_strided_slice %16 {offsets = [0, 0], sizes = [8, 32], strides = [1, 1]} : vector<8x128xf32> to vector<8x32xf32>
      %28 = vector.extract_strided_slice %18 {offsets = [0, 0], sizes = [8, 32], strides = [1, 1]} : vector<8x128xf32> to vector<8x32xf32>
      "tpu.trace_start"() <{level = 10 : i32, message = "qe,ke->qk"}> : () -> ()
      %cst_21 = arith.constant dense<0.000000e+00> : vector<8x8xf32>
      %29 = tpu.matmul %26, %27, %cst_21 {dimension_numbers = #tpu.dot_dimension_numbers<[1], [1], [0], [0], [0, 0, 1, 0], [], []>} : vector<8x32xf32>, vector<8x32xf32>, vector<8x8xf32> -> vector<8x8xf32>
      "tpu.trace_stop"() : () -> ()
      %30 = arith.addf %29, %22 : vector<8x8xf32>
      %31 = vector.extract_strided_slice %23 {offsets = [0, 0], sizes = [8, 1], strides = [1, 1]} : vector<8x4xf32> to vector<8x1xf32>
      %cst_22 = arith.constant dense<0xFF800000> : vector<8xf32>
      %32 = vector.multi_reduction <maximumf>, %30, %cst_22 [1] : vector<8x8xf32> to vector<8xf32>
      %33 = vector.shape_cast %32 : vector<8xf32> to vector<8x1xf32>
      %34 = arith.maximumf %31, %33 : vector<8x1xf32>
      %35 = arith.subf %31, %34 : vector<8x1xf32>
      %36 = math.exp %35 : vector<8x1xf32>
      %37 = vector.broadcast %34 : vector<8x1xf32> to vector<8x8xf32>
      %38 = arith.subf %30, %37 : vector<8x8xf32>
      %39 = math.exp %38 : vector<8x8xf32>
      %40 = vector.extract_strided_slice %24 {offsets = [0, 0], sizes = [8, 1], strides = [1, 1]} : vector<8x4xf32> to vector<8x1xf32>
      %41 = arith.mulf %36, %40 : vector<8x1xf32>
      %cst_23 = arith.constant dense<0.000000e+00> : vector<8xf32>
      %42 = vector.multi_reduction <add>, %39, %cst_23 [1] : vector<8x8xf32> to vector<8xf32>
      %43 = vector.shape_cast %42 : vector<8xf32> to vector<8x1xf32>
      %44 = arith.addf %41, %43 : vector<8x1xf32>
      "tpu.trace_start"() <{level = 10 : i32, message = "qk,kd->qd"}> : () -> ()
      %cst_24 = arith.constant dense<0.000000e+00> : vector<8x32xf32>
      %45 = tpu.matmul %39, %28, %cst_24 {dimension_numbers = #tpu.dot_dimension_numbers<[1], [0], [0], [1], [0, 0, 1, 1], [], []>} : vector<8x8xf32>, vector<8x32xf32>, vector<8x32xf32> -> vector<8x32xf32>
      "tpu.trace_stop"() : () -> ()
      %46 = vector.extract_strided_slice %25 {offsets = [0, 0], sizes = [8, 32], strides = [1, 1]} : vector<8x128xf32> to vector<8x32xf32>
      %47 = vector.broadcast %36 : vector<8x1xf32> to vector<8x32xf32>
      %48 = arith.mulf %47, %46 : vector<8x32xf32>
      %49 = arith.addf %48, %45 : vector<8x32xf32>
      %50 = vector.extract_strided_slice %14 {offsets = [0, 32], sizes = [8, 32], strides = [1, 1]} : vector<8x128xf32> to vector<8x32xf32>
      %51 = vector.extract_strided_slice %16 {offsets = [0, 32], sizes = [8, 32], strides = [1, 1]} : vector<8x128xf32> to vector<8x32xf32>
      %52 = vector.extract_strided_slice %18 {offsets = [0, 32], sizes = [8, 32], strides = [1, 1]} : vector<8x128xf32> to vector<8x32xf32>
      "tpu.trace_start"() <{level = 10 : i32, message = "qe,ke->qk"}> : () -> ()
      %cst_25 = arith.constant dense<0.000000e+00> : vector<8x8xf32>
      %53 = tpu.matmul %50, %51, %cst_25 {dimension_numbers = #tpu.dot_dimension_numbers<[1], [1], [0], [0], [0, 0, 1, 0], [], []>} : vector<8x32xf32>, vector<8x32xf32>, vector<8x8xf32> -> vector<8x8xf32>
      "tpu.trace_stop"() : () -> ()
      %54 = arith.addf %53, %22 : vector<8x8xf32>
      %55 = vector.extract_strided_slice %23 {offsets = [0, 1], sizes = [8, 1], strides = [1, 1]} : vector<8x4xf32> to vector<8x1xf32>
      %cst_26 = arith.constant dense<0xFF800000> : vector<8xf32>
      %56 = vector.multi_reduction <maximumf>, %54, %cst_26 [1] : vector<8x8xf32> to vector<8xf32>
      %57 = vector.shape_cast %56 : vector<8xf32> to vector<8x1xf32>
      %58 = arith.maximumf %55, %57 : vector<8x1xf32>
      %59 = arith.subf %55, %58 : vector<8x1xf32>
      %60 = math.exp %59 : vector<8x1xf32>
      %61 = vector.broadcast %58 : vector<8x1xf32> to vector<8x8xf32>
      %62 = arith.subf %54, %61 : vector<8x8xf32>
      %63 = math.exp %62 : vector<8x8xf32>
      %64 = vector.extract_strided_slice %24 {offsets = [0, 1], sizes = [8, 1], strides = [1, 1]} : vector<8x4xf32> to vector<8x1xf32>
      %65 = arith.mulf %60, %64 : vector<8x1xf32>
      %cst_27 = arith.constant dense<0.000000e+00> : vector<8xf32>
      %66 = vector.multi_reduction <add>, %63, %cst_27 [1] : vector<8x8xf32> to vector<8xf32>
      %67 = vector.shape_cast %66 : vector<8xf32> to vector<8x1xf32>
      %68 = arith.addf %65, %67 : vector<8x1xf32>
      "tpu.trace_start"() <{level = 10 : i32, message = "qk,kd->qd"}> : () -> ()
      %cst_28 = arith.constant dense<0.000000e+00> : vector<8x32xf32>
      %69 = tpu.matmul %63, %52, %cst_28 {dimension_numbers = #tpu.dot_dimension_numbers<[1], [0], [0], [1], [0, 0, 1, 1], [], []>} : vector<8x8xf32>, vector<8x32xf32>, vector<8x32xf32> -> vector<8x32xf32>
      "tpu.trace_stop"() : () -> ()
      %70 = vector.extract_strided_slice %25 {offsets = [0, 32], sizes = [8, 32], strides = [1, 1]} : vector<8x128xf32> to vector<8x32xf32>
      %71 = vector.broadcast %60 : vector<8x1xf32> to vector<8x32xf32>
      %72 = arith.mulf %71, %70 : vector<8x32xf32>
      %73 = arith.addf %72, %69 : vector<8x32xf32>
      %74 = vector.extract_strided_slice %14 {offsets = [0, 64], sizes = [8, 32], strides = [1, 1]} : vector<8x128xf32> to vector<8x32xf32>
      %75 = vector.extract_strided_slice %16 {offsets = [0, 64], sizes = [8, 32], strides = [1, 1]} : vector<8x128xf32> to vector<8x32xf32>
      %76 = vector.extract_strided_slice %18 {offsets = [0, 64], sizes = [8, 32], strides = [1, 1]} : vector<8x128xf32> to vector<8x32xf32>
      "tpu.trace_start"() <{level = 10 : i32, message = "qe,ke->qk"}> : () -> ()
      %cst_29 = arith.constant dense<0.000000e+00> : vector<8x8xf32>
      %77 = tpu.matmul %74, %75, %cst_29 {dimension_numbers = #tpu.dot_dimension_numbers<[1], [1], [0], [0], [0, 0, 1, 0], [], []>} : vector<8x32xf32>, vector<8x32xf32>, vector<8x8xf32> -> vector<8x8xf32>
      "tpu.trace_stop"() : () -> ()
      %78 = arith.addf %77, %22 : vector<8x8xf32>
      %79 = vector.extract_strided_slice %23 {offsets = [0, 2], sizes = [8, 1], strides = [1, 1]} : vector<8x4xf32> to vector<8x1xf32>
      %cst_30 = arith.constant dense<0xFF800000> : vector<8xf32>
      %80 = vector.multi_reduction <maximumf>, %78, %cst_30 [1] : vector<8x8xf32> to vector<8xf32>
      %81 = vector.shape_cast %80 : vector<8xf32> to vector<8x1xf32>
      %82 = arith.maximumf %79, %81 : vector<8x1xf32>
      %83 = arith.subf %79, %82 : vector<8x1xf32>
      %84 = math.exp %83 : vector<8x1xf32>
      %85 = vector.broadcast %82 : vector<8x1xf32> to vector<8x8xf32>
      %86 = arith.subf %78, %85 : vector<8x8xf32>
      %87 = math.exp %86 : vector<8x8xf32>
      %88 = vector.extract_strided_slice %24 {offsets = [0, 2], sizes = [8, 1], strides = [1, 1]} : vector<8x4xf32> to vector<8x1xf32>
      %89 = arith.mulf %84, %88 : vector<8x1xf32>
      %cst_31 = arith.constant dense<0.000000e+00> : vector<8xf32>
      %90 = vector.multi_reduction <add>, %87, %cst_31 [1] : vector<8x8xf32> to vector<8xf32>
      %91 = vector.shape_cast %90 : vector<8xf32> to vector<8x1xf32>
      %92 = arith.addf %89, %91 : vector<8x1xf32>
      "tpu.trace_start"() <{level = 10 : i32, message = "qk,kd->qd"}> : () -> ()
      %cst_32 = arith.constant dense<0.000000e+00> : vector<8x32xf32>
      %93 = tpu.matmul %87, %76, %cst_32 {dimension_numbers = #tpu.dot_dimension_numbers<[1], [0], [0], [1], [0, 0, 1, 1], [], []>} : vector<8x8xf32>, vector<8x32xf32>, vector<8x32xf32> -> vector<8x32xf32>
      "tpu.trace_stop"() : () -> ()
      %94 = vector.extract_strided_slice %25 {offsets = [0, 64], sizes = [8, 32], strides = [1, 1]} : vector<8x128xf32> to vector<8x32xf32>
      %95 = vector.broadcast %84 : vector<8x1xf32> to vector<8x32xf32>
      %96 = arith.mulf %95, %94 : vector<8x32xf32>
      %97 = arith.addf %96, %93 : vector<8x32xf32>
      %98 = vector.extract_strided_slice %14 {offsets = [0, 96], sizes = [8, 32], strides = [1, 1]} : vector<8x128xf32> to vector<8x32xf32>
      %99 = vector.extract_strided_slice %16 {offsets = [0, 96], sizes = [8, 32], strides = [1, 1]} : vector<8x128xf32> to vector<8x32xf32>
      %100 = vector.extract_strided_slice %18 {offsets = [0, 96], sizes = [8, 32], strides = [1, 1]} : vector<8x128xf32> to vector<8x32xf32>
      "tpu.trace_start"() <{level = 10 : i32, message = "qe,ke->qk"}> : () -> ()
      %cst_33 = arith.constant dense<0.000000e+00> : vector<8x8xf32>
      %101 = tpu.matmul %98, %99, %cst_33 {dimension_numbers = #tpu.dot_dimension_numbers<[1], [1], [0], [0], [0, 0, 1, 0], [], []>} : vector<8x32xf32>, vector<8x32xf32>, vector<8x8xf32> -> vector<8x8xf32>
      "tpu.trace_stop"() : () -> ()
      %102 = arith.addf %101, %22 : vector<8x8xf32>
      %103 = vector.extract_strided_slice %23 {offsets = [0, 3], sizes = [8, 1], strides = [1, 1]} : vector<8x4xf32> to vector<8x1xf32>
      %cst_34 = arith.constant dense<0xFF800000> : vector<8xf32>
      %104 = vector.multi_reduction <maximumf>, %102, %cst_34 [1] : vector<8x8xf32> to vector<8xf32>
      %105 = vector.shape_cast %104 : vector<8xf32> to vector<8x1xf32>
      %106 = arith.maximumf %103, %105 : vector<8x1xf32>
      %107 = arith.subf %103, %106 : vector<8x1xf32>
      %108 = math.exp %107 : vector<8x1xf32>
      %109 = vector.broadcast %106 : vector<8x1xf32> to vector<8x8xf32>
      %110 = arith.subf %102, %109 : vector<8x8xf32>
      %111 = math.exp %110 : vector<8x8xf32>
      %112 = vector.extract_strided_slice %24 {offsets = [0, 3], sizes = [8, 1], strides = [1, 1]} : vector<8x4xf32> to vector<8x1xf32>
      %113 = arith.mulf %108, %112 : vector<8x1xf32>
      %cst_35 = arith.constant dense<0.000000e+00> : vector<8xf32>
      %114 = vector.multi_reduction <add>, %111, %cst_35 [1] : vector<8x8xf32> to vector<8xf32>
      %115 = vector.shape_cast %114 : vector<8xf32> to vector<8x1xf32>
      %116 = arith.addf %113, %115 : vector<8x1xf32>
      "tpu.trace_start"() <{level = 10 : i32, message = "qk,kd->qd"}> : () -> ()
      %cst_36 = arith.constant dense<0.000000e+00> : vector<8x32xf32>
      %117 = tpu.matmul %111, %100, %cst_36 {dimension_numbers = #tpu.dot_dimension_numbers<[1], [0], [0], [1], [0, 0, 1, 1], [], []>} : vector<8x8xf32>, vector<8x32xf32>, vector<8x32xf32> -> vector<8x32xf32>
      "tpu.trace_stop"() : () -> ()
      %118 = vector.extract_strided_slice %25 {offsets = [0, 96], sizes = [8, 32], strides = [1, 1]} : vector<8x128xf32> to vector<8x32xf32>
      %119 = vector.broadcast %108 : vector<8x1xf32> to vector<8x32xf32>
      %120 = arith.mulf %119, %118 : vector<8x32xf32>
      %121 = arith.addf %120, %117 : vector<8x32xf32>
      %122 = tpu.concatenate %34, %58, %82, %106 in 1 : vector<8x1xf32>, vector<8x1xf32>, vector<8x1xf32>, vector<8x1xf32> -> vector<8x4xf32>
      %c0_37 = arith.constant 0 : index
      %c0_38 = arith.constant 0 : index
      %123 = vector.load %arg10[%c0_37, %c0_38] : memref<8x4xf32, #tpu.memory_space<vmem>>, vector<8x4xf32>
      tpu.vector_store %arg10[%c0_37, %c0_38], %122 {strides = array<i32>} : memref<8x4xf32, #tpu.memory_space<vmem>>, vector<8x4xf32>,
      %124 = tpu.concatenate %44, %68, %92, %116 in 1 : vector<8x1xf32>, vector<8x1xf32>, vector<8x1xf32>, vector<8x1xf32> -> vector<8x4xf32>
      %c0_39 = arith.constant 0 : index
      %c0_40 = arith.constant 0 : index
      %125 = vector.load %arg11[%c0_39, %c0_40] : memref<8x4xf32, #tpu.memory_space<vmem>>, vector<8x4xf32>
      tpu.vector_store %arg11[%c0_39, %c0_40], %124 {strides = array<i32>} : memref<8x4xf32, #tpu.memory_space<vmem>>, vector<8x4xf32>,
      %126 = tpu.concatenate %49, %73, %97, %121 in 1 : vector<8x32xf32>, vector<8x32xf32>, vector<8x32xf32>, vector<8x32xf32> -> vector<8x128xf32>
      %c0_41 = arith.constant 0 : index
      %c0_42 = arith.constant 0 : index
      %127 = vector.load %arg12[%c0_41, %c0_42] : memref<8x128xf32, #tpu.memory_space<vmem>>, vector<8x128xf32>
      tpu.vector_store %arg12[%c0_41, %c0_42], %126 {strides = array<i32>} : memref<8x128xf32, #tpu.memory_space<vmem>>, vector<8x128xf32>,
    } else {
    }
    %c0_i32_2 = arith.constant 0 : i32
    %8 = arith.cmpi eq, %arg2, %c0_i32_2 : i32
    %9 = arith.extui %8 : i1 to i32
    %c0_i32_3 = arith.constant 0 : i32
    %10 = arith.cmpi ne, %9, %c0_i32_3 : i32
    scf.if %10 {
      %c0 = arith.constant 0 : index
      %c0_4 = arith.constant 0 : index
      %11 = vector.load %arg12[%c0, %c0_4] : memref<8x128xf32, #tpu.memory_space<vmem>>, vector<8x128xf32>
      %c0_5 = arith.constant 0 : index
      %c0_6 = arith.constant 0 : index
      %12 = vector.load %arg11[%c0_5, %c0_6] : memref<8x4xf32, #tpu.memory_space<vmem>>, vector<8x4xf32>
      %13 = tpu.reciprocal %12 {approx = true} : vector<8x4xf32> -> vector<8x4xf32>
      %14 = arith.mulf %12, %13 : vector<8x4xf32>
      %cst = arith.constant 2.000000e+00 : f32
      %15 = vector.broadcast %cst : f32 to vector<8x4xf32>
      %16 = arith.subf %15, %14 : vector<8x4xf32>
      %17 = arith.mulf %13, %16 : vector<8x4xf32>
      %18 = vector.extract_strided_slice %11 {offsets = [0, 0], sizes = [8, 32], strides = [1, 1]} : vector<8x128xf32> to vector<8x32xf32>
      %19 = vector.extract_strided_slice %17 {offsets = [0, 0], sizes = [8, 1], strides = [1, 1]} : vector<8x4xf32> to vector<8x1xf32>
      %20 = vector.broadcast %19 : vector<8x1xf32> to vector<8x32xf32>
      %21 = arith.mulf %18, %20 : vector<8x32xf32>
      %22 = vector.extract_strided_slice %11 {offsets = [0, 32], sizes = [8, 32], strides = [1, 1]} : vector<8x128xf32> to vector<8x32xf32>
      %23 = vector.extract_strided_slice %17 {offsets = [0, 1], sizes = [8, 1], strides = [1, 1]} : vector<8x4xf32> to vector<8x1xf32>
      %24 = vector.broadcast %23 : vector<8x1xf32> to vector<8x32xf32>
      %25 = arith.mulf %22, %24 : vector<8x32xf32>
      %26 = vector.extract_strided_slice %11 {offsets = [0, 64], sizes = [8, 32], strides = [1, 1]} : vector<8x128xf32> to vector<8x32xf32>
      %27 = vector.extract_strided_slice %17 {offsets = [0, 2], sizes = [8, 1], strides = [1, 1]} : vector<8x4xf32> to vector<8x1xf32>
      %28 = vector.broadcast %27 : vector<8x1xf32> to vector<8x32xf32>
      %29 = arith.mulf %26, %28 : vector<8x32xf32>
      %30 = vector.extract_strided_slice %11 {offsets = [0, 96], sizes = [8, 32], strides = [1, 1]} : vector<8x128xf32> to vector<8x32xf32>
      %31 = vector.extract_strided_slice %17 {offsets = [0, 3], sizes = [8, 1], strides = [1, 1]} : vector<8x4xf32> to vector<8x1xf32>
      %32 = vector.broadcast %31 : vector<8x1xf32> to vector<8x32xf32>
      %33 = arith.mulf %30, %32 : vector<8x32xf32>
      %34 = tpu.concatenate %21, %25, %29, %33 in 1 : vector<8x32xf32>, vector<8x32xf32>, vector<8x32xf32>, vector<8x32xf32> -> vector<8x128xf32>
      %c0_7 = arith.constant 0 : index
      %c0_8 = arith.constant 0 : index
      %c0_9 = arith.constant 0 : index
      %35 = vector.load %arg9[%c0_7, %c0_8, %c0_9] : memref<1x8x128xf32, #tpu.memory_space<vmem>>, vector<1x8x128xf32>
      %36 = vector.shape_cast %35 : vector<1x8x128xf32> to vector<8x128xf32>
      %37 = vector.shape_cast %34 : vector<8x128xf32> to vector<1x8x128xf32>
      tpu.vector_store %arg9[%c0_7, %c0_8, %c0_9], %37 {strides = array<i32>} : memref<1x8x128xf32, #tpu.memory_space<vmem>>, vector<1x8x128xf32>,
    } else {
    }
    return
  }
  func.func @transform_0(%arg0: i32, %arg1: i32, %arg2: i32, %arg3: memref<1x1xi32, #tpu.memory_space<smem>>, %arg4: memref<1xi32, #tpu.memory_space<smem>>) -> (i32, i32, i32) {
    %c0_i32 = arith.constant 0 : i32
    %c0_i32_0 = arith.constant 0 : i32
    return %arg0, %arg1, %c0_i32 : i32, i32, i32
  }
  func.func @transform_1(%arg0: i32, %arg1: i32, %arg2: i32, %arg3: memref<1x1xi32, #tpu.memory_space<smem>>, %arg4: memref<1xi32, #tpu.memory_space<smem>>) -> (i32, i32, i32) {
    %0 = arith.index_cast %arg1 : i32 to index
    %1 = arith.index_cast %arg2 : i32 to index
    %2 = memref.load %arg3[%0, %1] : memref<1x1xi32, #tpu.memory_space<smem>>
    %c0_i32 = arith.constant 0 : i32
    %c0_i32_0 = arith.constant 0 : i32
    return %arg0, %2, %c0_i32 : i32, i32, i32
  }
  func.func @transform_2(%arg0: i32, %arg1: i32, %arg2: i32, %arg3: memref<1x1xi32, #tpu.memory_space<smem>>, %arg4: memref<1xi32, #tpu.memory_space<smem>>) -> (i32, i32, i32) {
    %0 = arith.index_cast %arg1 : i32 to index
    %1 = arith.index_cast %arg2 : i32 to index
    %2 = memref.load %arg3[%0, %1] : memref<1x1xi32, #tpu.memory_space<smem>>
    %c0_i32 = arith.constant 0 : i32
    %c0_i32_0 = arith.constant 0 : i32
    return %arg0, %2, %c0_i32 : i32, i32, i32
  }
  func.func @transform_3(%arg0: i32, %arg1: i32, %arg2: i32, %arg3: memref<1x1xi32, #tpu.memory_space<smem>>, %arg4: memref<1xi32, #tpu.memory_space<smem>>) -> (i32, i32) {
    %0 = arith.index_cast %arg1 : i32 to index
    %1 = arith.index_cast %arg2 : i32 to index
    %2 = memref.load %arg3[%0, %1] : memref<1x1xi32, #tpu.memory_space<smem>>
    %c0_i32 = arith.constant 0 : i32
    return %arg1, %2 : i32, i32
  }
  func.func @transform_4(%arg0: i32, %arg1: i32, %arg2: i32, %arg3: memref<1x1xi32, #tpu.memory_space<smem>>, %arg4: memref<1xi32, #tpu.memory_space<smem>>) -> (i32, i32, i32) {
    %c0_i32 = arith.constant 0 : i32
    %c0_i32_0 = arith.constant 0 : i32
    return %arg0, %arg1, %c0_i32 : i32, i32, i32
  }
}

</mosaic_0001>

<llo_original>
// kernel: tpu_custom_call.1
$region0: #{tpu_custom_call.1}
  #allocation0 [shape = 'u32[]', space=smem, size = 0x4, offset = 0x4, fixed_abs, tag = 'smem constant byte address 0x4 - core index']
  #allocation1 [shape = 'u32[144,128]{1,0:T(1,128)}', space=vmem, size = 0x12000, scoped, tag = 'internal scratch']
  #allocation2 [shape = 'f32[8,4]{1,0:T(8,128)}', space=vmem, size = 0x1000, scoped, tag = 'scratch operand']
  #allocation3 [shape = 'f32[8,4]{1,0:T(8,128)}', space=vmem, size = 0x1000, scoped, tag = 'scratch operand']
  #allocation4 [shape = 'f32[8,128]{1,0:T(8,128)}', space=vmem, size = 0x1000, scoped, tag = 'scratch operand']
  #allocation5 [shape = 's32[1]{0}', space=sflag, size = 0x4, scoped, tag = 'scoped memory for tpu_custom_call.1']
  #allocation6 [shape = 's32[1,1]{1,0:T(1,128)S(6)}', space=smem, size = 0x200, scoped, tag = 'prefetched SMEM operand 0']
  #allocation7 [shape = 's32[1]{0:T(128)S(6)}', space=smem, size = 0x200, scoped, tag = 'prefetched SMEM operand 1']
  %s0 = inlined_call_operand.<no memory space> [shape: s32[1,1], index: 0, kind: input, shape index: {}]
  %s1 = inlined_call_operand.<no memory space> [shape: s32[1], index: 1, kind: input, shape index: {}]
  %s2 = inlined_call_operand.hbm [shape: f32[2,8,128], index: 2, kind: input, shape index: {}]
  %s3 = inlined_call_operand.hbm [shape: f32[2,8,128], index: 3, kind: input, shape index: {}]
  %s4 = inlined_call_operand.hbm [shape: f32[2,8,128], index: 4, kind: input, shape index: {}]
  %s5 = inlined_call_operand.vmem [shape: s8[8,8], index: 5, kind: input, shape index: {}]
  %s6 = inlined_call_operand.hbm [shape: f32[2,8,128], index: 6, kind: output, shape index: {}]
  %s7 = sld [smem:[#allocation0]]
  $region73: #{tpu_custom_call.1} parent=0
    _
  %s9 = ssub.s32 1, %s7
  %s10 = scalar_select 0, %s9, %s7
  %11 = sst [smem:[#allocation6]] %s0
  %12 = sst [smem:[#allocation7]] %s1
  $region1: #{tpu_custom_call.1} parent=0
    #allocation8 [shape = 'u8[8192]{0}', space=vmem, size = 0x2000, scoped, tag = 'input window, operand 2']
    #allocation9 [shape = 's32[2]{0}', space=sflag, size = 0x8, scoped, tag = 'scoped memory for tpu_custom_call.1']
    #allocation10 [shape = 's32[2]{0}', space=sflag, size = 0x8, scoped, tag = 'scoped memory for tpu_custom_call.1']
    #allocation11 [shape = 'u8[8192]{0}', space=vmem, size = 0x2000, scoped, tag = 'input window, operand 3']
    #allocation12 [shape = 's32[2]{0}', space=sflag, size = 0x8, scoped, tag = 'scoped memory for tpu_custom_call.1']
    #allocation13 [shape = 'u8[8192]{0}', space=vmem, size = 0x2000, scoped, tag = 'input window, operand 4']
    #allocation14 [shape = 'u8[8192]{0}', space=vmem, size = 0x2000, scoped, tag = 'output window, operand 0']
    %13 = vsyncpa [#allocation9], 0
    %s14 = scalar_lea.sflag [#allocation9], 1
    %15 = vsyncpa %s14, 0
    %16 = vsyncpa [#allocation12], 0
    %s17 = scalar_lea.sflag [#allocation12], 1
    %18 = vsyncpa %s17, 0
    %19 = vsyncpa [#allocation10], 0
    %s20 = scalar_lea.sflag [#allocation10], 1
    %21 = vsyncpa %s20, 0
    loop: start=0, step=1, limit=4
    $region2: #{tpu_custom_call.1} parent=1 // loop_pre_header
      _
    $region3: #{tpu_custom_call.1} parent=1 // loop_header
      %s23 = sphi 0, %s27
      %p24 = scmp.ge.s32.totalorder %s23, 4
      %s30 = sphi 0, %s49
      %s31 = sphi 0, %s45
      %s32 = sphi 0, %s41
      %s33 = sphi 0, %s30
      %s34 = sphi 0, %s31
      %s35 = sphi 0, %s32
      %s36 = sphi 0, %s33
      %s37 = sphi 0, %s34
      %s38 = sphi 0, %s35
      %s54 = sphi 0, %s56
      %s57 = sphi 0, %s54
      %s58 = sphi 0, %s57
      %s74 = sphi 0, %s58
      %s98 = sphi 0, %s100
      %s101 = sphi 0, %s98
      %s102 = sphi 0, %s101
      %s118 = sphi 0, %s102
      %s142 = sphi 0, %s144
      %s145 = sphi 0, %s142
      %s146 = sphi 0, %s145
      %s162 = sphi 0, %s146
      %s186 = sphi 0, %s188
      %s189 = sphi 0, %s186
      %s190 = sphi 0, %s189
      %s206 = sphi 0, %s190
      %s214 = sphi 0, %s216
      %s217 = sphi 0, %s214
      %s218 = sphi 0, %s217
      %s234 = sphi 0, %s218
    $region4: #{tpu_custom_call.1} parent=1 // loop_header_branch
      %26 = sbr.rel (%p24) target = $region8
    $region5: #{tpu_custom_call.1} parent=1 // loop_body
      %s28 = ssub.s32 %s23, 1
      %s29 = ssub.s32 %s23, 2
      %s39 = sadd.s32 1, %s32
      %p40 = scmp.ge.s32.totalorder %s39, 1
      %s41 = scalar_select %p40, 0, %s39
      %s42 = sadd.s32 1, %s31
      %s43 = scalar_select %p40, %s42, %s31
      %p44 = scmp.ge.s32.totalorder %s43, 1
      %s45 = scalar_select %p44, 0, %s43
      %s46 = sadd.s32 1, %s30
      %s47 = scalar_select %p44, %s46, %s30
      %p48 = scmp.ge.s32.totalorder %s47, 2
      %s49 = scalar_select %p48, 0, %s47
      %s50 = ssub.s32 %s30, %s49
      %s51 = ssub.s32 %s31, %s45
      %s52 = sor.u32 %s50, %s51
      %p53 = scmp.eq.s32.totalorder %s52, 0
      %s55 = sadd.s32 %s54, 1
      %s56 = scalar_select %p53, %s54, %s55
      %p59 = pneg %p53
      %p60 = scmp.eq.s32.totalorder %s23, 1
      %p61 = por %p59, %p60
      %p62 = scmp.ne.s32.totalorder %s54, %s57
      %p63 = scmp.eq.s32.totalorder %s23, 0
      %p64 = por %p62, %p63
      %p65 = scmp.ne.s32.totalorder %s54, %s57
      %p66 = scmp.eq.s32.totalorder %s28, 1
      %p67 = por %p65, %p66
      %p68 = scmp.ne.s32.totalorder %s57, %s58
      %p69 = scmp.eq.s32.totalorder %s28, 0
      %p70 = por %p68, %p69
      %p71 = scmp.ne.s32.totalorder %s57, %s58
      %p72 = scmp.eq.s32.totalorder %s29, 1
      %p73 = por %p71, %p72
      %p75 = scmp.ne.s32.totalorder %s58, %s74
      %p76 = scmp.eq.s32.totalorder %s29, 0
      %p77 = por %p75, %p76
      %s78 = sshra.s32 %s32, 7
      %s79 = sand.u32 %s32, 127
      %s80 = sadd.s32 %s78, %s31
      %s81 = smul.u32 %s80, 128
      %s82 = sshra.s32 %s32, 7
      %s83 = sand.u32 %s32, 127
      %s84 = sadd.s32 %s81, %s83
      %s85 = sld [smem:[#allocation6 + %s84]]
      %s86 = sshra.s32 %s41, 7
      %s87 = sand.u32 %s41, 127
      %s88 = sadd.s32 %s86, %s45
      %s89 = smul.u32 %s88, 128
      %s90 = sshra.s32 %s41, 7
      %s91 = sand.u32 %s41, 127
      %s92 = sadd.s32 %s89, %s91
      %s93 = sld [smem:[#allocation6 + %s92]]
      %s94 = ssub.s32 %s30, %s49
      %s95 = ssub.s32 %s85, %s93
      %s96 = sor.u32 %s94, %s95
      %p97 = scmp.eq.s32.totalorder %s96, 0
      %s99 = sadd.s32 %s98, 1
      %s100 = scalar_select %p97, %s98, %s99
      %p103 = pneg %p97
      %p104 = scmp.eq.s32.totalorder %s23, 1
      %p105 = por %p103, %p104
      %p106 = scmp.ne.s32.totalorder %s98, %s101
      %p107 = scmp.eq.s32.totalorder %s23, 0
      %p108 = por %p106, %p107
      %p109 = scmp.ne.s32.totalorder %s98, %s101
      %p110 = scmp.eq.s32.totalorder %s28, 1
      %p111 = por %p109, %p110
      %p112 = scmp.ne.s32.totalorder %s101, %s102
      %p113 = scmp.eq.s32.totalorder %s28, 0
      %p114 = por %p112, %p113
      %p115 = scmp.ne.s32.totalorder %s101, %s102
      %p116 = scmp.eq.s32.totalorder %s29, 1
      %p117 = por %p115, %p116
      %p119 = scmp.ne.s32.totalorder %s102, %s118
      %p120 = scmp.eq.s32.totalorder %s29, 0
      %p121 = por %p119, %p120
      %s122 = sshra.s32 %s32, 7
      %s123 = sand.u32 %s32, 127
      %s124 = sadd.s32 %s122, %s31
      %s125 = smul.u32 %s124, 128
      %s126 = sshra.s32 %s32, 7
      %s127 = sand.u32 %s32, 127
      %s128 = sadd.s32 %s125, %s127
      %s129 = sld [smem:[#allocation6 + %s128]]
      %s130 = sshra.s32 %s41, 7
      %s131 = sand.u32 %s41, 127
      %s132 = sadd.s32 %s130, %s45
      %s133 = smul.u32 %s132, 128
      %s134 = sshra.s32 %s41, 7
      %s135 = sand.u32 %s41, 127
      %s136 = sadd.s32 %s133, %s135
      %s137 = sld [smem:[#allocation6 + %s136]]
      %s138 = ssub.s32 %s30, %s49
      %s139 = ssub.s32 %s129, %s137
      %s140 = sor.u32 %s138, %s139
      %p141 = scmp.eq.s32.totalorder %s140, 0
      %s143 = sadd.s32 %s142, 1
      %s144 = scalar_select %p141, %s142, %s143
      %p147 = pneg %p141
      %p148 = scmp.eq.s32.totalorder %s23, 1
      %p149 = por %p147, %p148
      %p150 = scmp.ne.s32.totalorder %s142, %s145
      %p151 = scmp.eq.s32.totalorder %s23, 0
      %p152 = por %p150, %p151
      %p153 = scmp.ne.s32.totalorder %s142, %s145
      %p154 = scmp.eq.s32.totalorder %s28, 1
      %p155 = por %p153, %p154
      %p156 = scmp.ne.s32.totalorder %s145, %s146
      %p157 = scmp.eq.s32.totalorder %s28, 0
      %p158 = por %p156, %p157
      %p159 = scmp.ne.s32.totalorder %s145, %s146
      %p160 = scmp.eq.s32.totalorder %s29, 1
      %p161 = por %p159, %p160
      %p163 = scmp.ne.s32.totalorder %s146, %s162
      %p164 = scmp.eq.s32.totalorder %s29, 0
      %p165 = por %p163, %p164
      %s166 = sshra.s32 %s32, 7
      %s167 = sand.u32 %s32, 127
      %s168 = sadd.s32 %s166, %s31
      %s169 = smul.u32 %s168, 128
      %s170 = sshra.s32 %s32, 7
      %s171 = sand.u32 %s32, 127
      %s172 = sadd.s32 %s169, %s171
      %s173 = sld [smem:[#allocation6 + %s172]]
      %s174 = sshra.s32 %s41, 7
      %s175 = sand.u32 %s41, 127
      %s176 = sadd.s32 %s174, %s45
      %s177 = smul.u32 %s176, 128
      %s178 = sshra.s32 %s41, 7
      %s179 = sand.u32 %s41, 127
      %s180 = sadd.s32 %s177, %s179
      %s181 = sld [smem:[#allocation6 + %s180]]
      %s182 = ssub.s32 %s31, %s45
      %s183 = ssub.s32 %s173, %s181
      %s184 = sor.u32 %s182, %s183
      %p185 = scmp.eq.s32.totalorder %s184, 0
      %s187 = sadd.s32 %s186, 1
      %s188 = scalar_select %p185, %s186, %s187
      %p191 = pneg %p185
      %p192 = scmp.eq.s32.totalorder %s23, 1
      %p193 = por %p191, %p192
      %p194 = scmp.ne.s32.totalorder %s186, %s189
      %p195 = scmp.eq.s32.totalorder %s23, 0
      %p196 = por %p194, %p195
      %p197 = scmp.ne.s32.totalorder %s186, %s189
      %p198 = scmp.eq.s32.totalorder %s28, 1
      %p199 = por %p197, %p198
      %p200 = scmp.ne.s32.totalorder %s189, %s190
      %p201 = scmp.eq.s32.totalorder %s28, 0
      %p202 = por %p200, %p201
      %p203 = scmp.ne.s32.totalorder %s189, %s190
      %p204 = scmp.eq.s32.totalorder %s29, 1
      %p205 = por %p203, %p204
      %p207 = scmp.ne.s32.totalorder %s190, %s206
      %p208 = scmp.eq.s32.totalorder %s29, 0
      %p209 = por %p207, %p208
      %s210 = ssub.s32 %s30, %s49
      %s211 = ssub.s32 %s31, %s45
      %s212 = sor.u32 %s210, %s211
      %p213 = scmp.eq.s32.totalorder %s212, 0
      %s215 = sadd.s32 %s214, 1
      %s216 = scalar_select %p213, %s214, %s215
      %p219 = pneg %p213
      %p220 = scmp.eq.s32.totalorder %s23, 1
      %p221 = por %p219, %p220
      %p222 = scmp.ne.s32.totalorder %s214, %s217
      %p223 = scmp.eq.s32.totalorder %s23, 0
      %p224 = por %p222, %p223
      %p225 = scmp.ne.s32.totalorder %s214, %s217
      %p226 = scmp.eq.s32.totalorder %s28, 1
      %p227 = por %p225, %p226
      %p228 = scmp.ne.s32.totalorder %s217, %s218
      %p229 = scmp.eq.s32.totalorder %s28, 0
      %p230 = por %p228, %p229
      %p231 = scmp.ne.s32.totalorder %s217, %s218
      %p232 = scmp.eq.s32.totalorder %s29, 1
      %p233 = por %p231, %p232
      %p235 = scmp.ne.s32.totalorder %s218, %s234
      %p236 = scmp.eq.s32.totalorder %s29, 0
      %p237 = por %p235, %p236
      %p238 = scmp.le.s32.totalorder 1, %s23
      %p239 = scmp.lt.s32.totalorder %s23, 3
      %p240 = pnand %p238, %p239
      %p241 = pneg %p240
      // Predicated region
      $region9: #{tpu_custom_call.1} parent=5 // pred_check
        _
      $region10: #{tpu_custom_call.1} parent=5 // pred_check_branch
        %243 = sbr.rel (%p240) target = $region12
      $region11: #{tpu_custom_call.1} parent=5 // pred_region
        %s244 = ssub.s32 %s23, 1
        // Predicated region
        $region13: #{tpu_custom_call.1} parent=11 // pred_check
          %p245 = pneg %p202
        $region14: #{tpu_custom_call.1} parent=11 // pred_check_branch
          %247 = sbr.rel (%p245) target = $region16
        $region15: #{tpu_custom_call.1} parent=11 // pred_region
          %s248 = sshra.s32 %s35, 7
          %s249 = sand.u32 %s35, 127
          %s250 = sadd.s32 %s248, %s34
          %s251 = smul.u32 %s250, 128
          %s252 = sshra.s32 %s35, 7
          %s253 = sand.u32 %s35, 127
          %s254 = sadd.s32 %s251, %s253
          %s255 = sld [smem:[#allocation6 + %s254]]
          %p256 = scmp.lt.s32.totalorder %s34, 0
          %s257 = scalar_select %p256, %s34, 0
          %p258 = scmp.lt.s32.totalorder %s255, 0
          %s259 = scalar_select %p258, %s255, 0
          %s260 = sadd.s32 %s259, %s257
          %s261 = smul.addr %s260, 2
          %s262 = scalar_lea.vmem %s5, %s261
          %s263 = sshra.s32 %s35, 7
          %s264 = sand.u32 %s35, 127
          %s265 = sadd.s32 %s263, %s34
          %s266 = smul.u32 %s265, 128
          %s267 = sshra.s32 %s35, 7
          %s268 = sand.u32 %s35, 127
          %s269 = sadd.s32 %s266, %s268
          %s270 = sld [smem:[#allocation6 + %s269]]
        $region16: #{tpu_custom_call.1} parent=11 // pred_fallthru
          _
      $region12: #{tpu_custom_call.1} parent=5 // pred_fallthru
        _
      %p271 = scmp.lt.s32.totalorder %s23, 2
      // Predicated region
      $region17: #{tpu_custom_call.1} parent=5 // pred_check
        %p272 = pneg %p271
      $region18: #{tpu_custom_call.1} parent=5 // pred_check_branch
        %274 = sbr.rel (%p272) target = $region20
      $region19: #{tpu_custom_call.1} parent=5 // pred_region
        // Predicated region
        $region21: #{tpu_custom_call.1} parent=19 // pred_check
          %p275 = pneg %p64
        $region22: #{tpu_custom_call.1} parent=19 // pred_check_branch
          %277 = sbr.rel (%p275) target = $region24
        $region23: #{tpu_custom_call.1} parent=19 // pred_region
          %s278 = sand.u32 %s54, 1
          %s279 = scalar_lea.sflag [#allocation9], %s278
          %s280 = sand.u32 %s54, 1
          %s281 = smul.addr %s280, 8
          %s282 = scalar_lea.vmem [#allocation8], %s281
          %s284 = ssub.s32 128, 128
          %285 = vsyncadd %s279, %s284
          %s286 = sadd.s32 %s31, %s30
          %s287 = smul.addr %s286, 128
          %s288 = scalar_lea.hbm %s2, %s287
          %s290 = sshll.u32 %s282, 4
          %s291 = int_to_ptr.vmem [resolvable:$true] %s290
          %293 = dma.hbm_to_vmem [thread:$0]  %s288, 128, %s291, %s279
        $region24: #{tpu_custom_call.1} parent=19 // pred_fallthru
          _
        // Predicated region
        $region25: #{tpu_custom_call.1} parent=19 // pred_check
          %p294 = pneg %p108
        $region26: #{tpu_custom_call.1} parent=19 // pred_check_branch
          %296 = sbr.rel (%p294) target = $region28
        $region27: #{tpu_custom_call.1} parent=19 // pred_region
          %s297 = sand.u32 %s23, 1
          %s298 = scalar_lea.sflag [#allocation12], %s297
          %s299 = sand.u32 %s98, 1
          %s300 = smul.addr %s299, 8
          %s301 = scalar_lea.vmem [#allocation11], %s300
          %s302 = sshra.s32 %s32, 7
          %s303 = sand.u32 %s32, 127
          %s304 = sadd.s32 %s302, %s31
          %s305 = smul.u32 %s304, 128
          %s306 = sshra.s32 %s32, 7
          %s307 = sand.u32 %s32, 127
          %s308 = sadd.s32 %s305, %s307
          %s309 = sld [smem:[#allocation6 + %s308]]
          %s311 = ssub.s32 128, 128
          %312 = vsyncadd %s298, %s311
          %s313 = sadd.s32 %s309, %s30
          %s314 = smul.addr %s313, 128
          %s315 = scalar_lea.hbm %s3, %s314
          %s317 = sshll.u32 %s301, 4
          %s318 = int_to_ptr.vmem [resolvable:$true] %s317
          %320 = dma.hbm_to_vmem [thread:$0]  %s315, 128, %s318, %s298
        $region28: #{tpu_custom_call.1} parent=19 // pred_fallthru
          _
        // Predicated region
        $region29: #{tpu_custom_call.1} parent=19 // pred_check
          %p321 = pneg %p152
        $region30: #{tpu_custom_call.1} parent=19 // pred_check_branch
          %323 = sbr.rel (%p321) target = $region32
        $region31: #{tpu_custom_call.1} parent=19 // pred_region
          %s324 = sand.u32 %s23, 1
          %s325 = scalar_lea.sflag [#allocation12], %s324
          %s326 = sand.u32 %s142, 1
          %s327 = smul.addr %s326, 8
          %s328 = scalar_lea.vmem [#allocation13], %s327
          %s329 = sshra.s32 %s32, 7
          %s330 = sand.u32 %s32, 127
          %s331 = sadd.s32 %s329, %s31
          %s332 = smul.u32 %s331, 128
          %s333 = sshra.s32 %s32, 7
          %s334 = sand.u32 %s32, 127
          %s335 = sadd.s32 %s332, %s334
          %s336 = sld [smem:[#allocation6 + %s335]]
          %s338 = ssub.s32 128, 128
          %339 = vsyncadd %s325, %s338
          %s340 = sadd.s32 %s336, %s30
          %s341 = smul.addr %s340, 128
          %s342 = scalar_lea.hbm %s4, %s341
          %s344 = sshll.u32 %s328, 4
          %s345 = int_to_ptr.vmem [resolvable:$true] %s344
          %347 = dma.hbm_to_vmem [thread:$0]  %s342, 128, %s345, %s325
        $region32: #{tpu_custom_call.1} parent=19 // pred_fallthru
          _
      $region20: #{tpu_custom_call.1} parent=5 // pred_fallthru
        _
      %p348 = scmp.le.s32.totalorder 1, %s23
      %p349 = scmp.lt.s32.totalorder %s23, 3
      %p350 = pnand %p348, %p349
      %p351 = pneg %p350
      // Predicated region
      $region33: #{tpu_custom_call.1} parent=5 // pred_check
        _
      $region34: #{tpu_custom_call.1} parent=5 // pred_check_branch
        %353 = sbr.rel (%p350) target = $region36
      $region35: #{tpu_custom_call.1} parent=5 // pred_region
        %s354 = ssub.s32 %s23, 1
        %s355 = sand.u32 %s57, 1
        %s356 = scalar_lea.sflag [#allocation9], %s355
        %s357 = sand.u32 %s57, 1
        %s358 = smul.addr %s357, 8
        %s359 = scalar_lea.vmem [#allocation8], %s358
        // Predicated region
        $region37: #{tpu_custom_call.1} parent=35 // pred_check
          %p360 = pneg %p70
        $region38: #{tpu_custom_call.1} parent=35 // pred_check_branch
          %362 = sbr.rel (%p360) target = $region40
        $region39: #{tpu_custom_call.1} parent=35 // pred_region
          %363 = dma.done %s356, 128
        $region40: #{tpu_custom_call.1} parent=35 // pred_fallthru
          _
        %s364 = sand.u32 %s28, 1
        %s365 = scalar_lea.sflag [#allocation12], %s364
        %s366 = sand.u32 %s101, 1
        %s367 = smul.addr %s366, 8
        %s368 = scalar_lea.vmem [#allocation11], %s367
        // Predicated region
        $region41: #{tpu_custom_call.1} parent=35 // pred_check
          %p369 = pneg %p114
        $region42: #{tpu_custom_call.1} parent=35 // pred_check_branch
          %371 = sbr.rel (%p369) target = $region44
        $region43: #{tpu_custom_call.1} parent=35 // pred_region
          %372 = dma.done %s365, 128
        $region44: #{tpu_custom_call.1} parent=35 // pred_fallthru
          _
        %s373 = sand.u32 %s28, 1
        %s374 = scalar_lea.sflag [#allocation12], %s373
        %s375 = sand.u32 %s145, 1
        %s376 = smul.addr %s375, 8
        %s377 = scalar_lea.vmem [#allocation13], %s376
        // Predicated region
        $region45: #{tpu_custom_call.1} parent=35 // pred_check
          %p378 = pneg %p158
        $region46: #{tpu_custom_call.1} parent=35 // pred_check_branch
          %380 = sbr.rel (%p378) target = $region48
        $region47: #{tpu_custom_call.1} parent=35 // pred_region
          %381 = dma.done %s374, 128
        $region48: #{tpu_custom_call.1} parent=35 // pred_fallthru
          _
        %s382 = sand.u32 %s57, 1
        %s383 = scalar_lea.sflag [#allocation9], %s382
        %s384 = sand.u32 %s57, 1
        %s385 = smul.addr %s384, 8
        %s386 = scalar_lea.vmem [#allocation8], %s385
        %p387 = pneg %p70
        %p388 = pneg %p67
        %s389 = sand.u32 %s28, 1
        %s390 = scalar_lea.sflag [#allocation12], %s389
        %s391 = sand.u32 %s101, 1
        %s392 = smul.addr %s391, 8
        %s393 = scalar_lea.vmem [#allocation11], %s392
        %p394 = pneg %p114
        %p395 = pneg %p111
        %s396 = sand.u32 %s28, 1
        %s397 = scalar_lea.sflag [#allocation12], %s396
        %s398 = sand.u32 %s145, 1
        %s399 = smul.addr %s398, 8
        %s400 = scalar_lea.vmem [#allocation13], %s399
        %p401 = pneg %p158
        %p402 = pneg %p155
        %s403 = sshra.s32 %s35, 7
        %s404 = sand.u32 %s35, 127
        %s405 = sadd.s32 %s403, %s34
        %s406 = smul.u32 %s405, 128
        %s407 = sshra.s32 %s35, 7
        %s408 = sand.u32 %s35, 127
        %s409 = sadd.s32 %s406, %s408
        %s410 = sld [smem:[#allocation6 + %s409]]
        %p411 = scmp.lt.s32.totalorder %s34, 0
        %s412 = scalar_select %p411, %s34, 0
        %p413 = scmp.lt.s32.totalorder %s410, 0
        %s414 = scalar_select %p413, %s410, 0
        %s415 = sadd.s32 %s414, %s412
        %s416 = smul.addr %s415, 2
        %s417 = scalar_lea.vmem %s5, %s416
        %p418 = pneg %p202
        %p419 = pneg %p199
        %p420 = pneg %p230
        %p421 = pneg %p227
        %s422 = sand.u32 %s217, 1
        %s423 = scalar_lea.sflag [#allocation10], %s422
        %s424 = sand.u32 %s217, 1
        %s425 = smul.addr %s424, 8
        %s426 = scalar_lea.vmem [#allocation14], %s425
        %s427 = sshra.s32 %s35, 7
        %s428 = sand.u32 %s35, 127
        %s429 = sadd.s32 %s427, %s34
        %s430 = smul.u32 %s429, 128
        %s431 = sshra.s32 %s35, 7
        %s432 = sand.u32 %s35, 127
        %s433 = sadd.s32 %s430, %s432
        %s434 = sld [smem:[#allocation6 + %s433]]
        %s435 = sshra.s32 %s35, 7
        %s436 = sand.u32 %s35, 127
        %s437 = sadd.s32 %s435, %s34
        %s438 = smul.u32 %s437, 128
        %s439 = sshra.s32 %s35, 7
        %s440 = sand.u32 %s35, 127
        %s441 = sadd.s32 %s438, %s440
        %s442 = sld [smem:[#allocation6 + %s441]]
        %s443 = sshra.s32 %s35, 7
        %s444 = sand.u32 %s35, 127
        %s445 = sadd.s32 %s443, %s34
        %s446 = smul.u32 %s445, 128
        %s447 = sshra.s32 %s35, 7
        %s448 = sand.u32 %s35, 127
        %s449 = sadd.s32 %s446, %s448
        %s450 = sld [smem:[#allocation6 + %s449]]
        %p451 = scmp.lt.s32.totalorder %s34, 0
        %s452 = scalar_select %p451, %s34, 0
        %p453 = scmp.lt.s32.totalorder %s450, 0
        %s454 = scalar_select %p453, %s450, 0
        %s455 = sadd.s32 %s454, %s452
        %s456 = smul.addr %s455, 2
        %s457 = scalar_lea.vmem %s5, %s456
        %s458 = sshra.s32 %s35, 7
        %s459 = sand.u32 %s35, 127
        %s460 = sadd.s32 %s458, %s34
        %s461 = smul.u32 %s460, 128
        %s462 = sshra.s32 %s35, 7
        %s463 = sand.u32 %s35, 127
        %s464 = sadd.s32 %s461, %s463
        %s465 = sld [smem:[#allocation6 + %s464]]
        %p466 = scmp.eq.s32.totalorder %s35, 0
        // Predicated region
        $region49: #{tpu_custom_call.1} parent=35 // pred_check
          %p467 = pneg %p466
        $region50: #{tpu_custom_call.1} parent=35 // pred_check_branch
          %469 = sbr.rel (%p467) target = $region52
        $region51: #{tpu_custom_call.1} parent=35 // pred_region
          %vm470 = vcmask 31744
          %471 = vst.msk [vmem:[#allocation2] sm:$0xff] %vm470, -1e+30
          %472 = vst.msk [vmem:[#allocation3] sm:$0xff] %vm470, 0.0
          %473 = vst [vmem:[#allocation4] sm:$0xff] 0.0
        $region52: #{tpu_custom_call.1} parent=35 // pred_fallthru
          _
        %s474 = sld [smem:[#allocation7 + %s34]]
        %p475 = scmp.lt.s32.totalorder %s35, %s474
        // Predicated region
        $region53: #{tpu_custom_call.1} parent=35 // pred_check
          %p476 = pneg %p475
        $region54: #{tpu_custom_call.1} parent=35 // pred_check_branch
          %478 = sbr.rel (%p476) target = $region56
        $region55: #{tpu_custom_call.1} parent=35 // pred_region
          %v479 = vld [vmem:[%s359] sm:$0xff]
          %v480 = vmul.f32 %v479, 0.17677669
          %v481 = vld [vmem:[%s368] sm:$0xff]
          %v482 = vld [vmem:[%s377] sm:$0xff]
          %v483 = vld [vmem:[%s457] sm:$0x3]
          %v484 = vunpack.c.0.s8 %v483
          %v485 = vcvt.s32.f32 %v484
          %v486 = vmul.f32 %v485, -1e+30
          %v487 = vld [vmem:[#allocation2] sm:$0xff]
          %v488 = vld [vmem:[#allocation3] sm:$0xff]
          %v489 = vld [vmem:[#allocation4] sm:$0xff]
          %vm490 = vcmask 261120
          %v492 = vsel %vm490, %v480, 0
          %v495 = vsel %vm490, %v481, 0
          %497 = vmatprep.subr.mxu0 0.0
          %498 = vmatpush1.xpose.msra.mxu0 %v495
          %499 = vmatprep.subr.mxu0 0.0
          %500 = vmatpush1.xpose.msra.mxu0 0.0
          %501 = vmatprep.subr.mxu0 0.0
          %502 = vmatpush1.xpose.msra.mxu0 0.0
          %503 = vmatprep.subr.mxu0 0.0
          %504 = vmatpush1.xpose.msra.mxu0 0.0
          %505 = vmatprep.subr.mxu0 0.0
          %506 = vmatpush1.xpose.msra.mxu0 0.0
          %507 = vmatprep.subr.mxu0 0.0
          %508 = vmatpush1.xpose.msra.mxu0 0.0
          %509 = vmatprep.subr.mxu0 0.0
          %510 = vmatpush1.xpose.msra.mxu0 0.0
          %511 = vmatprep.subr.mxu0 0.0
          %512 = vmatpush1.xpose.msra.mxu0 0.0
          %513 = vmatprep.subr.mxu0 0.0
          %514 = vmatpush1.xpose.msra.mxu0 0.0
          %515 = vmatprep.subr.mxu0 0.0
          %516 = vmatpush1.xpose.msra.mxu0 0.0
          %517 = vmatprep.subr.mxu0 0.0
          %518 = vmatpush1.xpose.msra.mxu0 0.0
          %519 = vmatprep.subr.mxu0 0.0
          %520 = vmatpush1.xpose.msra.mxu0 0.0
          %521 = vmatprep.subr.mxu0 0.0
          %522 = vmatpush1.xpose.msra.mxu0 0.0
          %523 = vmatprep.subr.mxu0 0.0
          %524 = vmatpush1.xpose.msra.mxu0 0.0
          %525 = vmatprep.subr.mxu0 0.0
          %526 = vmatpush1.xpose.msra.mxu0 0.0
          %527 = vmatprep.subr.mxu0 0.0
          %528 = vmatpush1.xpose.msra.mxu0 0.0
          %529 = vmatprep.subr.mxu0 0.0
          %530 = vmatpush1.xpose.msra.mxu0 0.0
          %531 = vmatprep.subr.mxu0 0.0
          %532 = vmatpush1.xpose.msra.mxu0 0.0
          %533 = vmatprep.subr.mxu0 0.0
          %534 = vmatpush1.xpose.msra.mxu0 0.0
          %535 = vmatprep.subr.mxu0 0.0
          %536 = vmatpush1.xpose.msra.mxu0 0.0
          %537 = vmatprep.subr.mxu0 0.0
          %538 = vmatpush1.xpose.msra.mxu0 0.0
          %539 = vmatprep.subr.mxu0 0.0
          %540 = vmatpush1.xpose.msra.mxu0 0.0
          %541 = vmatprep.subr.mxu0 0.0
          %542 = vmatpush1.xpose.msra.mxu0 0.0
          %543 = vmatprep.subr.mxu0 0.0
          %544 = vmatpush1.xpose.msra.mxu0 0.0
          %545 = vmatprep.subr.mxu0 0.0
          %546 = vmatpush1.xpose.msra.mxu0 0.0
          %547 = vmatprep.subr.mxu0 0.0
          %548 = vmatpush1.xpose.msra.mxu0 0.0
          %549 = vmatprep.subr.mxu0 0.0
          %550 = vmatpush1.xpose.msra.mxu0 0.0
          %551 = vmatprep.subr.mxu0 0.0
          %552 = vmatpush1.xpose.msra.mxu0 0.0
          %553 = vmatprep.subr.mxu0 0.0
          %554 = vmatpush1.xpose.msra.mxu0 0.0
          %555 = vmatprep.subr.mxu0 0.0
          %556 = vmatpush1.xpose.msra.mxu0 0.0
          %557 = vmatprep.subr.mxu0 0.0
          %558 = vmatpush1.xpose.msra.mxu0 0.0
          %559 = vmatprep.subr.mxu0 0.0
          %560 = vmatpush1.xpose.msra.mxu0 0.0
          %561 = vmatprep.mubr.f32.mxu0 0.0
          %562 = vmatmul.mubr.f32.gmra.mrb[0].mxu0 %v492
          %v563 = vpop.f32.mrb[0].mxu0
          %v564 = vadd.f32 %v486, %v563
          %v565 = vpop.f32.mrb[0].mxu0
          %566 = vdwg.mxu0
          %vm567 = vcmask 64512
          %v568 = vsel %vm567, %v564, -inf
          %569 = vmax.xlane.f32.xlu0 %v568
          %v570 = vpop.xlane.xlu0 %569
          %v571 = vmax.f32 %v487, %v570
          %v572 = vsub.f32 %v487, %v571
          %v573 = vmul.f32 %v572, 1.442695
          %v574 = vpow.pop %v573
          %576 = vset.pattern.permute.xlu0 0
          %577 = vperm.xlu0 %576, %v571
          %v578 = vpop.permute.xlu0 %577
          %v580 = vsub.f32 %v564, %v578
          %v581 = vmul.f32 %v580, 1.442695
          %v582 = vpow.pop %v581
          %v583 = vmul.f32 %v574, %v488
          %v584 = vsel %vm567, %v582, 0.0
          %585 = vadd.xlane.f32.xlu0 %v584
          %v586 = vpop.xlane.xlu0 %585
          %v587 = vadd.f32 %v583, %v586
          %v589 = vsel %vm567, %v582, 0
          %591 = vmatprep.subr.mxu0 0.0
          %592 = vmatpush1.msra.mxu0 %v482
          %593 = vmatprep.subr.mxu0 0.0
          %594 = vmatpush1.msra.mxu0 0.0
          %595 = vmatprep.subr.mxu0 0.0
          %596 = vmatpush1.msra.mxu0 0.0
          %597 = vmatprep.subr.mxu0 0.0
          %598 = vmatpush1.msra.mxu0 0.0
          %599 = vmatprep.subr.mxu0 0.0
          %600 = vmatpush1.msra.mxu0 0.0
          %601 = vmatprep.subr.mxu0 0.0
          %602 = vmatpush1.msra.mxu0 0.0
          %603 = vmatprep.subr.mxu0 0.0
          %604 = vmatpush1.msra.mxu0 0.0
          %605 = vmatprep.subr.mxu0 0.0
          %606 = vmatpush1.msra.mxu0 0.0
          %607 = vmatprep.subr.mxu0 0.0
          %608 = vmatpush1.msra.mxu0 0.0
          %609 = vmatprep.subr.mxu0 0.0
          %610 = vmatpush1.msra.mxu0 0.0
          %611 = vmatprep.subr.mxu0 0.0
          %612 = vmatpush1.msra.mxu0 0.0
          %613 = vmatprep.subr.mxu0 0.0
          %614 = vmatpush1.msra.mxu0 0.0
          %615 = vmatprep.subr.mxu0 0.0
          %616 = vmatpush1.msra.mxu0 0.0
          %617 = vmatprep.subr.mxu0 0.0
          %618 = vmatpush1.msra.mxu0 0.0
          %619 = vmatprep.subr.mxu0 0.0
          %620 = vmatpush1.msra.mxu0 0.0
          %621 = vmatprep.subr.mxu0 0.0
          %622 = vmatpush1.msra.mxu0 0.0
          %623 = vmatprep.subr.mxu0 0.0
          %624 = vmatpush1.msra.mxu0 0.0
          %625 = vmatprep.subr.mxu0 0.0
          %626 = vmatpush1.msra.mxu0 0.0
          %627 = vmatprep.subr.mxu0 0.0
          %628 = vmatpush1.msra.mxu0 0.0
          %629 = vmatprep.subr.mxu0 0.0
          %630 = vmatpush1.msra.mxu0 0.0
          %631 = vmatprep.subr.mxu0 0.0
          %632 = vmatpush1.msra.mxu0 0.0
          %633 = vmatprep.subr.mxu0 0.0
          %634 = vmatpush1.msra.mxu0 0.0
          %635 = vmatprep.subr.mxu0 0.0
          %636 = vmatpush1.msra.mxu0 0.0
          %637 = vmatprep.subr.mxu0 0.0
          %638 = vmatpush1.msra.mxu0 0.0
          %639 = vmatprep.subr.mxu0 0.0
          %640 = vmatpush1.msra.mxu0 0.0
          %641 = vmatprep.subr.mxu0 0.0
          %642 = vmatpush1.msra.mxu0 0.0
          %643 = vmatprep.subr.mxu0 0.0
          %644 = vmatpush1.msra.mxu0 0.0
          %645 = vmatprep.subr.mxu0 0.0
          %646 = vmatpush1.msra.mxu0 0.0
          %647 = vmatprep.subr.mxu0 0.0
          %648 = vmatpush1.msra.mxu0 0.0
          %649 = vmatprep.subr.mxu0 0.0
          %650 = vmatpush1.msra.mxu0 0.0
          %651 = vmatprep.subr.mxu0 0.0
          %652 = vmatpush1.msra.mxu0 0.0
          %653 = vmatprep.subr.mxu0 0.0
          %654 = vmatpush1.msra.mxu0 0.0
          %655 = vmatprep.mubr.f32.mxu0 0.0
          %656 = vmatmul.mubr.f32.gmra.mrb[0].mxu0 %v589
          %v657 = vpop.f32.mrb[0].mxu0
          %v658 = vadd.f32 0.0, %v657
          %v659 = vpop.f32.mrb[0].mxu0
          %660 = vdwg.mxu0
          %662 = vset.pattern.permute.xlu0 0
          %663 = vperm.xlu0 %662, %v574
          %v664 = vpop.permute.xlu0 %663
          %v666 = vmul.f32 %v664, %v489
          %v667 = vadd.f32 %v666, %v658
          %668 = vrot.lane.b32.xlu0 %v480, 96
          %v669 = vpop.permute.xlu0 %668
          %670 = vrot.lane.b32.xlu0 %v481, 96
          %v671 = vpop.permute.xlu0 %670
          %v672 = vsel %vm490, %v669, 0
          %v674 = vsel %vm490, %v671, 0
          %676 = vmatprep.subr.mxu0 0.0
          %677 = vmatpush1.xpose.msra.mxu0 %v674
          %678 = vmatprep.subr.mxu0 0.0
          %679 = vmatpush1.xpose.msra.mxu0 0.0
          %680 = vmatprep.subr.mxu0 0.0
          %681 = vmatpush1.xpose.msra.mxu0 0.0
          %682 = vmatprep.subr.mxu0 0.0
          %683 = vmatpush1.xpose.msra.mxu0 0.0
          %684 = vmatprep.subr.mxu0 0.0
          %685 = vmatpush1.xpose.msra.mxu0 0.0
          %686 = vmatprep.subr.mxu0 0.0
          %687 = vmatpush1.xpose.msra.mxu0 0.0
          %688 = vmatprep.subr.mxu0 0.0
          %689 = vmatpush1.xpose.msra.mxu0 0.0
          %690 = vmatprep.subr.mxu0 0.0
          %691 = vmatpush1.xpose.msra.mxu0 0.0
          %692 = vmatprep.subr.mxu0 0.0
          %693 = vmatpush1.xpose.msra.mxu0 0.0
          %694 = vmatprep.subr.mxu0 0.0
          %695 = vmatpush1.xpose.msra.mxu0 0.0
          %696 = vmatprep.subr.mxu0 0.0
          %697 = vmatpush1.xpose.msra.mxu0 0.0
          %698 = vmatprep.subr.mxu0 0.0
          %699 = vmatpush1.xpose.msra.mxu0 0.0
          %700 = vmatprep.subr.mxu0 0.0
          %701 = vmatpush1.xpose.msra.mxu0 0.0
          %702 = vmatprep.subr.mxu0 0.0
          %703 = vmatpush1.xpose.msra.mxu0 0.0
          %704 = vmatprep.subr.mxu0 0.0
          %705 = vmatpush1.xpose.msra.mxu0 0.0
          %706 = vmatprep.subr.mxu0 0.0
          %707 = vmatpush1.xpose.msra.mxu0 0.0
          %708 = vmatprep.subr.mxu0 0.0
          %709 = vmatpush1.xpose.msra.mxu0 0.0
          %710 = vmatprep.subr.mxu0 0.0
          %711 = vmatpush1.xpose.msra.mxu0 0.0
          %712 = vmatprep.subr.mxu0 0.0
          %713 = vmatpush1.xpose.msra.mxu0 0.0
          %714 = vmatprep.subr.mxu0 0.0
          %715 = vmatpush1.xpose.msra.mxu0 0.0
          %716 = vmatprep.subr.mxu0 0.0
          %717 = vmatpush1.xpose.msra.mxu0 0.0
          %718 = vmatprep.subr.mxu0 0.0
          %719 = vmatpush1.xpose.msra.mxu0 0.0
          %720 = vmatprep.subr.mxu0 0.0
          %721 = vmatpush1.xpose.msra.mxu0 0.0
          %722 = vmatprep.subr.mxu0 0.0
          %723 = vmatpush1.xpose.msra.mxu0 0.0
          %724 = vmatprep.subr.mxu0 0.0
          %725 = vmatpush1.xpose.msra.mxu0 0.0
          %726 = vmatprep.subr.mxu0 0.0
          %727 = vmatpush1.xpose.msra.mxu0 0.0
          %728 = vmatprep.subr.mxu0 0.0
          %729 = vmatpush1.xpose.msra.mxu0 0.0
          %730 = vmatprep.subr.mxu0 0.0
          %731 = vmatpush1.xpose.msra.mxu0 0.0
          %732 = vmatprep.subr.mxu0 0.0
          %733 = vmatpush1.xpose.msra.mxu0 0.0
          %734 = vmatprep.subr.mxu0 0.0
          %735 = vmatpush1.xpose.msra.mxu0 0.0
          %736 = vmatprep.subr.mxu0 0.0
          %737 = vmatpush1.xpose.msra.mxu0 0.0
          %738 = vmatprep.subr.mxu0 0.0
          %739 = vmatpush1.xpose.msra.mxu0 0.0
          %740 = vmatprep.mubr.f32.mxu0 0.0
          %741 = vmatmul.mubr.f32.gmra.mrb[0].mxu0 %v672
          %v742 = vpop.f32.mrb[0].mxu0
          %v743 = vadd.f32 %v486, %v742
          %v744 = vpop.f32.mrb[0].mxu0
          %745 = vdwg.mxu0
          %v746 = vsel %vm567, %v743, -inf
          %747 = vmax.xlane.f32.xlu0 %v746
          %v748 = vpop.xlane.xlu0 %747
          %v749 = vmax.f32 %v487, %v748
          %v750 = vsub.f32 %v487, %v749
          %v751 = vmul.f32 %v750, 1.442695
          %v752 = vpow.pop %v751
          %754 = vset.pattern.permute.xlu0 1
          %755 = vperm.xlu0 %754, %v749
          %v756 = vpop.permute.xlu0 %755
          %v758 = vsub.f32 %v743, %v756
          %v759 = vmul.f32 %v758, 1.442695
          %v760 = vpow.pop %v759
          %v761 = vmul.f32 %v752, %v488
          %v762 = vsel %vm567, %v760, 0.0
          %763 = vadd.xlane.f32.xlu0 %v762
          %v764 = vpop.xlane.xlu0 %763
          %v765 = vadd.f32 %v761, %v764
          %767 = vrot.lane.b32.xlu0 %v482, 96
          %v768 = vpop.permute.xlu0 %767
          %v771 = vsel %vm567, %v760, 0
          %773 = vmatprep.subr.mxu0 0.0
          %774 = vmatpush1.msra.mxu0 %v768
          %775 = vmatprep.subr.mxu0 0.0
          %776 = vmatpush1.msra.mxu0 0.0
          %777 = vmatprep.subr.mxu0 0.0
          %778 = vmatpush1.msra.mxu0 0.0
          %779 = vmatprep.subr.mxu0 0.0
          %780 = vmatpush1.msra.mxu0 0.0
          %781 = vmatprep.subr.mxu0 0.0
          %782 = vmatpush1.msra.mxu0 0.0
          %783 = vmatprep.subr.mxu0 0.0
          %784 = vmatpush1.msra.mxu0 0.0
          %785 = vmatprep.subr.mxu0 0.0
          %786 = vmatpush1.msra.mxu0 0.0
          %787 = vmatprep.subr.mxu0 0.0
          %788 = vmatpush1.msra.mxu0 0.0
          %789 = vmatprep.subr.mxu0 0.0
          %790 = vmatpush1.msra.mxu0 0.0
          %791 = vmatprep.subr.mxu0 0.0
          %792 = vmatpush1.msra.mxu0 0.0
          %793 = vmatprep.subr.mxu0 0.0
          %794 = vmatpush1.msra.mxu0 0.0
          %795 = vmatprep.subr.mxu0 0.0
          %796 = vmatpush1.msra.mxu0 0.0
          %797 = vmatprep.subr.mxu0 0.0
          %798 = vmatpush1.msra.mxu0 0.0
          %799 = vmatprep.subr.mxu0 0.0
          %800 = vmatpush1.msra.mxu0 0.0
          %801 = vmatprep.subr.mxu0 0.0
          %802 = vmatpush1.msra.mxu0 0.0
          %803 = vmatprep.subr.mxu0 0.0
          %804 = vmatpush1.msra.mxu0 0.0
          %805 = vmatprep.subr.mxu0 0.0
          %806 = vmatpush1.msra.mxu0 0.0
          %807 = vmatprep.subr.mxu0 0.0
          %808 = vmatpush1.msra.mxu0 0.0
          %809 = vmatprep.subr.mxu0 0.0
          %810 = vmatpush1.msra.mxu0 0.0
          %811 = vmatprep.subr.mxu0 0.0
          %812 = vmatpush1.msra.mxu0 0.0
          %813 = vmatprep.subr.mxu0 0.0
          %814 = vmatpush1.msra.mxu0 0.0
          %815 = vmatprep.subr.mxu0 0.0
          %816 = vmatpush1.msra.mxu0 0.0
          %817 = vmatprep.subr.mxu0 0.0
          %818 = vmatpush1.msra.mxu0 0.0
          %819 = vmatprep.subr.mxu0 0.0
          %820 = vmatpush1.msra.mxu0 0.0
          %821 = vmatprep.subr.mxu0 0.0
          %822 = vmatpush1.msra.mxu0 0.0
          %823 = vmatprep.subr.mxu0 0.0
          %824 = vmatpush1.msra.mxu0 0.0
          %825 = vmatprep.subr.mxu0 0.0
          %826 = vmatpush1.msra.mxu0 0.0
          %827 = vmatprep.subr.mxu0 0.0
          %828 = vmatpush1.msra.mxu0 0.0
          %829 = vmatprep.subr.mxu0 0.0
          %830 = vmatpush1.msra.mxu0 0.0
          %831 = vmatprep.subr.mxu0 0.0
          %832 = vmatpush1.msra.mxu0 0.0
          %833 = vmatprep.subr.mxu0 0.0
          %834 = vmatpush1.msra.mxu0 0.0
          %835 = vmatprep.subr.mxu0 0.0
          %836 = vmatpush1.msra.mxu0 0.0
          %837 = vmatprep.mubr.f32.mxu0 0.0
          %838 = vmatmul.mubr.f32.gmra.mrb[0].mxu0 %v771
          %v839 = vpop.f32.mrb[0].mxu0
          %v840 = vadd.f32 0.0, %v839
          %v841 = vpop.f32.mrb[0].mxu0
          %842 = vdwg.mxu0
          %844 = vset.pattern.permute.xlu0 1
          %845 = vperm.xlu0 %844, %v752
          %v846 = vpop.permute.xlu0 %845
          %v848 = vmul.f32 %v846, %v489
          %850 = vrot.lane.b32.xlu0 %v840, 32
          %v851 = vpop.permute.xlu0 %850
          %v853 = vadd.f32 %v848, %v851
          %854 = vrot.lane.b32.xlu0 %v480, 64
          %v855 = vpop.permute.xlu0 %854
          %856 = vrot.lane.b32.xlu0 %v481, 64
          %v857 = vpop.permute.xlu0 %856
          %v858 = vsel %vm490, %v855, 0
          %v860 = vsel %vm490, %v857, 0
          %862 = vmatprep.subr.mxu0 0.0
          %863 = vmatpush1.xpose.msra.mxu0 %v860
          %864 = vmatprep.subr.mxu0 0.0
          %865 = vmatpush1.xpose.msra.mxu0 0.0
          %866 = vmatprep.subr.mxu0 0.0
          %867 = vmatpush1.xpose.msra.mxu0 0.0
          %868 = vmatprep.subr.mxu0 0.0
          %869 = vmatpush1.xpose.msra.mxu0 0.0
          %870 = vmatprep.subr.mxu0 0.0
          %871 = vmatpush1.xpose.msra.mxu0 0.0
          %872 = vmatprep.subr.mxu0 0.0
          %873 = vmatpush1.xpose.msra.mxu0 0.0
          %874 = vmatprep.subr.mxu0 0.0
          %875 = vmatpush1.xpose.msra.mxu0 0.0
          %876 = vmatprep.subr.mxu0 0.0
          %877 = vmatpush1.xpose.msra.mxu0 0.0
          %878 = vmatprep.subr.mxu0 0.0
          %879 = vmatpush1.xpose.msra.mxu0 0.0
          %880 = vmatprep.subr.mxu0 0.0
          %881 = vmatpush1.xpose.msra.mxu0 0.0
          %882 = vmatprep.subr.mxu0 0.0
          %883 = vmatpush1.xpose.msra.mxu0 0.0
          %884 = vmatprep.subr.mxu0 0.0
          %885 = vmatpush1.xpose.msra.mxu0 0.0
          %886 = vmatprep.subr.mxu0 0.0
          %887 = vmatpush1.xpose.msra.mxu0 0.0
          %888 = vmatprep.subr.mxu0 0.0
          %889 = vmatpush1.xpose.msra.mxu0 0.0
          %890 = vmatprep.subr.mxu0 0.0
          %891 = vmatpush1.xpose.msra.mxu0 0.0
          %892 = vmatprep.subr.mxu0 0.0
          %893 = vmatpush1.xpose.msra.mxu0 0.0
          %894 = vmatprep.subr.mxu0 0.0
          %895 = vmatpush1.xpose.msra.mxu0 0.0
          %896 = vmatprep.subr.mxu0 0.0
          %897 = vmatpush1.xpose.msra.mxu0 0.0
          %898 = vmatprep.subr.mxu0 0.0
          %899 = vmatpush1.xpose.msra.mxu0 0.0
          %900 = vmatprep.subr.mxu0 0.0
          %901 = vmatpush1.xpose.msra.mxu0 0.0
          %902 = vmatprep.subr.mxu0 0.0
          %903 = vmatpush1.xpose.msra.mxu0 0.0
          %904 = vmatprep.subr.mxu0 0.0
          %905 = vmatpush1.xpose.msra.mxu0 0.0
          %906 = vmatprep.subr.mxu0 0.0
          %907 = vmatpush1.xpose.msra.mxu0 0.0
          %908 = vmatprep.subr.mxu0 0.0
          %909 = vmatpush1.xpose.msra.mxu0 0.0
          %910 = vmatprep.subr.mxu0 0.0
          %911 = vmatpush1.xpose.msra.mxu0 0.0
          %912 = vmatprep.subr.mxu0 0.0
          %913 = vmatpush1.xpose.msra.mxu0 0.0
          %914 = vmatprep.subr.mxu0 0.0
          %915 = vmatpush1.xpose.msra.mxu0 0.0
          %916 = vmatprep.subr.mxu0 0.0
          %917 = vmatpush1.xpose.msra.mxu0 0.0
          %918 = vmatprep.subr.mxu0 0.0
          %919 = vmatpush1.xpose.msra.mxu0 0.0
          %920 = vmatprep.subr.mxu0 0.0
          %921 = vmatpush1.xpose.msra.mxu0 0.0
          %922 = vmatprep.subr.mxu0 0.0
          %923 = vmatpush1.xpose.msra.mxu0 0.0
          %924 = vmatprep.subr.mxu0 0.0
          %925 = vmatpush1.xpose.msra.mxu0 0.0
          %926 = vmatprep.mubr.f32.mxu0 0.0
          %927 = vmatmul.mubr.f32.gmra.mrb[0].mxu0 %v858
          %v928 = vpop.f32.mrb[0].mxu0
          %v929 = vadd.f32 %v486, %v928
          %v930 = vpop.f32.mrb[0].mxu0
          %931 = vdwg.mxu0
          %v932 = vsel %vm567, %v929, -inf
          %933 = vmax.xlane.f32.xlu0 %v932
          %v934 = vpop.xlane.xlu0 %933
          %v935 = vmax.f32 %v487, %v934
          %v936 = vsub.f32 %v487, %v935
          %v937 = vmul.f32 %v936, 1.442695
          %v938 = vpow.pop %v937
          %940 = vset.pattern.permute.xlu0 2
          %941 = vperm.xlu0 %940, %v935
          %v942 = vpop.permute.xlu0 %941
          %v944 = vsub.f32 %v929, %v942
          %v945 = vmul.f32 %v944, 1.442695
          %v946 = vpow.pop %v945
          %v947 = vmul.f32 %v938, %v488
          %v948 = vsel %vm567, %v946, 0.0
          %949 = vadd.xlane.f32.xlu0 %v948
          %v950 = vpop.xlane.xlu0 %949
          %v951 = vadd.f32 %v947, %v950
          %952 = vrot.lane.b32.xlu0 %v482, 64
          %v953 = vpop.permute.xlu0 %952
          %v956 = vsel %vm567, %v946, 0
          %958 = vmatprep.subr.mxu0 0.0
          %959 = vmatpush1.msra.mxu0 %v953
          %960 = vmatprep.subr.mxu0 0.0
          %961 = vmatpush1.msra.mxu0 0.0
          %962 = vmatprep.subr.mxu0 0.0
          %963 = vmatpush1.msra.mxu0 0.0
          %964 = vmatprep.subr.mxu0 0.0
          %965 = vmatpush1.msra.mxu0 0.0
          %966 = vmatprep.subr.mxu0 0.0
          %967 = vmatpush1.msra.mxu0 0.0
          %968 = vmatprep.subr.mxu0 0.0
          %969 = vmatpush1.msra.mxu0 0.0
          %970 = vmatprep.subr.mxu0 0.0
          %971 = vmatpush1.msra.mxu0 0.0
          %972 = vmatprep.subr.mxu0 0.0
          %973 = vmatpush1.msra.mxu0 0.0
          %974 = vmatprep.subr.mxu0 0.0
          %975 = vmatpush1.msra.mxu0 0.0
          %976 = vmatprep.subr.mxu0 0.0
          %977 = vmatpush1.msra.mxu0 0.0
          %978 = vmatprep.subr.mxu0 0.0
          %979 = vmatpush1.msra.mxu0 0.0
          %980 = vmatprep.subr.mxu0 0.0
          %981 = vmatpush1.msra.mxu0 0.0
          %982 = vmatprep.subr.mxu0 0.0
          %983 = vmatpush1.msra.mxu0 0.0
          %984 = vmatprep.subr.mxu0 0.0
          %985 = vmatpush1.msra.mxu0 0.0
          %986 = vmatprep.subr.mxu0 0.0
          %987 = vmatpush1.msra.mxu0 0.0
          %988 = vmatprep.subr.mxu0 0.0
          %989 = vmatpush1.msra.mxu0 0.0
          %990 = vmatprep.subr.mxu0 0.0
          %991 = vmatpush1.msra.mxu0 0.0
          %992 = vmatprep.subr.mxu0 0.0
          %993 = vmatpush1.msra.mxu0 0.0
          %994 = vmatprep.subr.mxu0 0.0
          %995 = vmatpush1.msra.mxu0 0.0
          %996 = vmatprep.subr.mxu0 0.0
          %997 = vmatpush1.msra.mxu0 0.0
          %998 = vmatprep.subr.mxu0 0.0
          %999 = vmatpush1.msra.mxu0 0.0
          %1000 = vmatprep.subr.mxu0 0.0
          %1001 = vmatpush1.msra.mxu0 0.0
          %1002 = vmatprep.subr.mxu0 0.0
          %1003 = vmatpush1.msra.mxu0 0.0
          %1004 = vmatprep.subr.mxu0 0.0
          %1005 = vmatpush1.msra.mxu0 0.0
          %1006 = vmatprep.subr.mxu0 0.0
          %1007 = vmatpush1.msra.mxu0 0.0
          %1008 = vmatprep.subr.mxu0 0.0
          %1009 = vmatpush1.msra.mxu0 0.0
          %1010 = vmatprep.subr.mxu0 0.0
          %1011 = vmatpush1.msra.mxu0 0.0
          %1012 = vmatprep.subr.mxu0 0.0
          %1013 = vmatpush1.msra.mxu0 0.0
          %1014 = vmatprep.subr.mxu0 0.0
          %1015 = vmatpush1.msra.mxu0 0.0
          %1016 = vmatprep.subr.mxu0 0.0
          %1017 = vmatpush1.msra.mxu0 0.0
          %1018 = vmatprep.subr.mxu0 0.0
          %1019 = vmatpush1.msra.mxu0 0.0
          %1020 = vmatprep.subr.mxu0 0.0
          %1021 = vmatpush1.msra.mxu0 0.0
          %1022 = vmatprep.mubr.f32.mxu0 0.0
          %1023 = vmatmul.mubr.f32.gmra.mrb[0].mxu0 %v956
          %v1024 = vpop.f32.mrb[0].mxu0
          %v1025 = vadd.f32 0.0, %v1024
          %v1026 = vpop.f32.mrb[0].mxu0
          %1027 = vdwg.mxu0
          %1029 = vset.pattern.permute.xlu0 2
          %1030 = vperm.xlu0 %1029, %v938
          %v1031 = vpop.permute.xlu0 %1030
          %v1033 = vmul.f32 %v1031, %v489
          %1035 = vrot.lane.b32.xlu0 %v1025, 64
          %v1036 = vpop.permute.xlu0 %1035
          %v1038 = vadd.f32 %v1033, %v1036
          %1039 = vrot.lane.b32.xlu0 %v480, 32
          %v1040 = vpop.permute.xlu0 %1039
          %1041 = vrot.lane.b32.xlu0 %v481, 32
          %v1042 = vpop.permute.xlu0 %1041
          %v1043 = vsel %vm490, %v1040, 0
          %v1045 = vsel %vm490, %v1042, 0
          %1047 = vmatprep.subr.mxu0 0.0
          %1048 = vmatpush1.xpose.msra.mxu0 %v1045
          %1049 = vmatprep.subr.mxu0 0.0
          %1050 = vmatpush1.xpose.msra.mxu0 0.0
          %1051 = vmatprep.subr.mxu0 0.0
          %1052 = vmatpush1.xpose.msra.mxu0 0.0
          %1053 = vmatprep.subr.mxu0 0.0
          %1054 = vmatpush1.xpose.msra.mxu0 0.0
          %1055 = vmatprep.subr.mxu0 0.0
          %1056 = vmatpush1.xpose.msra.mxu0 0.0
          %1057 = vmatprep.subr.mxu0 0.0
          %1058 = vmatpush1.xpose.msra.mxu0 0.0
          %1059 = vmatprep.subr.mxu0 0.0
          %1060 = vmatpush1.xpose.msra.mxu0 0.0
          %1061 = vmatprep.subr.mxu0 0.0
          %1062 = vmatpush1.xpose.msra.mxu0 0.0
          %1063 = vmatprep.subr.mxu0 0.0
          %1064 = vmatpush1.xpose.msra.mxu0 0.0
          %1065 = vmatprep.subr.mxu0 0.0
          %1066 = vmatpush1.xpose.msra.mxu0 0.0
          %1067 = vmatprep.subr.mxu0 0.0
          %1068 = vmatpush1.xpose.msra.mxu0 0.0
          %1069 = vmatprep.subr.mxu0 0.0
          %1070 = vmatpush1.xpose.msra.mxu0 0.0
          %1071 = vmatprep.subr.mxu0 0.0
          %1072 = vmatpush1.xpose.msra.mxu0 0.0
          %1073 = vmatprep.subr.mxu0 0.0
          %1074 = vmatpush1.xpose.msra.mxu0 0.0
          %1075 = vmatprep.subr.mxu0 0.0
          %1076 = vmatpush1.xpose.msra.mxu0 0.0
          %1077 = vmatprep.subr.mxu0 0.0
          %1078 = vmatpush1.xpose.msra.mxu0 0.0
          %1079 = vmatprep.subr.mxu0 0.0
          %1080 = vmatpush1.xpose.msra.mxu0 0.0
          %1081 = vmatprep.subr.mxu0 0.0
          %1082 = vmatpush1.xpose.msra.mxu0 0.0
          %1083 = vmatprep.subr.mxu0 0.0
          %1084 = vmatpush1.xpose.msra.mxu0 0.0
          %1085 = vmatprep.subr.mxu0 0.0
          %1086 = vmatpush1.xpose.msra.mxu0 0.0
          %1087 = vmatprep.subr.mxu0 0.0
          %1088 = vmatpush1.xpose.msra.mxu0 0.0
          %1089 = vmatprep.subr.mxu0 0.0
          %1090 = vmatpush1.xpose.msra.mxu0 0.0
          %1091 = vmatprep.subr.mxu0 0.0
          %1092 = vmatpush1.xpose.msra.mxu0 0.0
          %1093 = vmatprep.subr.mxu0 0.0
          %1094 = vmatpush1.xpose.msra.mxu0 0.0
          %1095 = vmatprep.subr.mxu0 0.0
          %1096 = vmatpush1.xpose.msra.mxu0 0.0
          %1097 = vmatprep.subr.mxu0 0.0
          %1098 = vmatpush1.xpose.msra.mxu0 0.0
          %1099 = vmatprep.subr.mxu0 0.0
          %1100 = vmatpush1.xpose.msra.mxu0 0.0
          %1101 = vmatprep.subr.mxu0 0.0
          %1102 = vmatpush1.xpose.msra.mxu0 0.0
          %1103 = vmatprep.subr.mxu0 0.0
          %1104 = vmatpush1.xpose.msra.mxu0 0.0
          %1105 = vmatprep.subr.mxu0 0.0
          %1106 = vmatpush1.xpose.msra.mxu0 0.0
          %1107 = vmatprep.subr.mxu0 0.0
          %1108 = vmatpush1.xpose.msra.mxu0 0.0
          %1109 = vmatprep.subr.mxu0 0.0
          %1110 = vmatpush1.xpose.msra.mxu0 0.0
          %1111 = vmatprep.mubr.f32.mxu0 0.0
          %1112 = vmatmul.mubr.f32.gmra.mrb[0].mxu0 %v1043
          %v1113 = vpop.f32.mrb[0].mxu0
          %v1114 = vadd.f32 %v486, %v1113
          %v1115 = vpop.f32.mrb[0].mxu0
          %1116 = vdwg.mxu0
          %v1117 = vsel %vm567, %v1114, -inf
          %1118 = vmax.xlane.f32.xlu0 %v1117
          %v1119 = vpop.xlane.xlu0 %1118
          %v1120 = vmax.f32 %v487, %v1119
          %v1121 = vsub.f32 %v487, %v1120
          %v1122 = vmul.f32 %v1121, 1.442695
          %v1123 = vpow.pop %v1122
          %1125 = vset.pattern.permute.xlu0 3
          %1126 = vperm.xlu0 %1125, %v1120
          %v1127 = vpop.permute.xlu0 %1126
          %v1129 = vsub.f32 %v1114, %v1127
          %v1130 = vmul.f32 %v1129, 1.442695
          %v1131 = vpow.pop %v1130
          %v1132 = vmul.f32 %v1123, %v488
          %v1133 = vsel %vm567, %v1131, 0.0
          %1134 = vadd.xlane.f32.xlu0 %v1133
          %v1135 = vpop.xlane.xlu0 %1134
          %v1136 = vadd.f32 %v1132, %v1135
          %1137 = vrot.lane.b32.xlu0 %v482, 32
          %v1138 = vpop.permute.xlu0 %1137
          %v1141 = vsel %vm567, %v1131, 0
          %1143 = vmatprep.subr.mxu0 0.0
          %1144 = vmatpush1.msra.mxu0 %v1138
          %1145 = vmatprep.subr.mxu0 0.0
          %1146 = vmatpush1.msra.mxu0 0.0
          %1147 = vmatprep.subr.mxu0 0.0
          %1148 = vmatpush1.msra.mxu0 0.0
          %1149 = vmatprep.subr.mxu0 0.0
          %1150 = vmatpush1.msra.mxu0 0.0
          %1151 = vmatprep.subr.mxu0 0.0
          %1152 = vmatpush1.msra.mxu0 0.0
          %1153 = vmatprep.subr.mxu0 0.0
          %1154 = vmatpush1.msra.mxu0 0.0
          %1155 = vmatprep.subr.mxu0 0.0
          %1156 = vmatpush1.msra.mxu0 0.0
          %1157 = vmatprep.subr.mxu0 0.0
          %1158 = vmatpush1.msra.mxu0 0.0
          %1159 = vmatprep.subr.mxu0 0.0
          %1160 = vmatpush1.msra.mxu0 0.0
          %1161 = vmatprep.subr.mxu0 0.0
          %1162 = vmatpush1.msra.mxu0 0.0
          %1163 = vmatprep.subr.mxu0 0.0
          %1164 = vmatpush1.msra.mxu0 0.0
          %1165 = vmatprep.subr.mxu0 0.0
          %1166 = vmatpush1.msra.mxu0 0.0
          %1167 = vmatprep.subr.mxu0 0.0
          %1168 = vmatpush1.msra.mxu0 0.0
          %1169 = vmatprep.subr.mxu0 0.0
          %1170 = vmatpush1.msra.mxu0 0.0
          %1171 = vmatprep.subr.mxu0 0.0
          %1172 = vmatpush1.msra.mxu0 0.0
          %1173 = vmatprep.subr.mxu0 0.0
          %1174 = vmatpush1.msra.mxu0 0.0
          %1175 = vmatprep.subr.mxu0 0.0
          %1176 = vmatpush1.msra.mxu0 0.0
          %1177 = vmatprep.subr.mxu0 0.0
          %1178 = vmatpush1.msra.mxu0 0.0
          %1179 = vmatprep.subr.mxu0 0.0
          %1180 = vmatpush1.msra.mxu0 0.0
          %1181 = vmatprep.subr.mxu0 0.0
          %1182 = vmatpush1.msra.mxu0 0.0
          %1183 = vmatprep.subr.mxu0 0.0
          %1184 = vmatpush1.msra.mxu0 0.0
          %1185 = vmatprep.subr.mxu0 0.0
          %1186 = vmatpush1.msra.mxu0 0.0
          %1187 = vmatprep.subr.mxu0 0.0
          %1188 = vmatpush1.msra.mxu0 0.0
          %1189 = vmatprep.subr.mxu0 0.0
          %1190 = vmatpush1.msra.mxu0 0.0
          %1191 = vmatprep.subr.mxu0 0.0
          %1192 = vmatpush1.msra.mxu0 0.0
          %1193 = vmatprep.subr.mxu0 0.0
          %1194 = vmatpush1.msra.mxu0 0.0
          %1195 = vmatprep.subr.mxu0 0.0
          %1196 = vmatpush1.msra.mxu0 0.0
          %1197 = vmatprep.subr.mxu0 0.0
          %1198 = vmatpush1.msra.mxu0 0.0
          %1199 = vmatprep.subr.mxu0 0.0
          %1200 = vmatpush1.msra.mxu0 0.0
          %1201 = vmatprep.subr.mxu0 0.0
          %1202 = vmatpush1.msra.mxu0 0.0
          %1203 = vmatprep.subr.mxu0 0.0
          %1204 = vmatpush1.msra.mxu0 0.0
          %1205 = vmatprep.subr.mxu0 0.0
          %1206 = vmatpush1.msra.mxu0 0.0
          %1207 = vmatprep.mubr.f32.mxu0 0.0
          %1208 = vmatmul.mubr.f32.gmra.mrb[0].mxu0 %v1141
          %v1209 = vpop.f32.mrb[0].mxu0
          %v1210 = vadd.f32 0.0, %v1209
          %v1211 = vpop.f32.mrb[0].mxu0
          %1212 = vdwg.mxu0
          %1214 = vset.pattern.permute.xlu0 3
          %1215 = vperm.xlu0 %1214, %v1123
          %v1216 = vpop.permute.xlu0 %1215
          %v1218 = vmul.f32 %v1216, %v489
          %1220 = vrot.lane.b32.xlu0 %v1210, 96
          %v1221 = vpop.permute.xlu0 %1220
          %v1223 = vadd.f32 %v1218, %v1221
          %vm1224 = vcmask 7168
          %v1225 = vsel %vm1224, %v571, %v749
          %vm1226 = vcmask 15360
          %v1227 = vsel %vm1226, %v1225, %v935
          %vm1228 = vcmask 23552
          %v1229 = vsel %vm1228, %v1227, %v1120
          %vm1230 = vcmask 31744
          %1231 = vst.msk [vmem:[#allocation2] sm:$0xff] %vm1230, %v1229
          %v1232 = vsel %vm1224, %v587, %v765
          %v1233 = vsel %vm1226, %v1232, %v951
          %v1234 = vsel %vm1228, %v1233, %v1136
          %1235 = vst.msk [vmem:[#allocation3] sm:$0xff] %vm1230, %v1234
          %v1236 = vsel %vm490, %v667, %v853
          %vm1237 = vcmask 523264
          %v1238 = vsel %vm1237, %v1236, %v1038
          %vm1239 = vcmask 785408
          %v1240 = vsel %vm1239, %v1238, %v1223
          %1241 = vst [vmem:[#allocation4] sm:$0xff] %v1240
        $region56: #{tpu_custom_call.1} parent=35 // pred_fallthru
          _
        // Predicated region
        $region57: #{tpu_custom_call.1} parent=35 // pred_check
          %p1242 = pneg %p466
        $region58: #{tpu_custom_call.1} parent=35 // pred_check_branch
          %1244 = sbr.rel (%p1242) target = $region60
        $region59: #{tpu_custom_call.1} parent=35 // pred_region
          %v1245 = vld [vmem:[#allocation4] sm:$0xff]
          %v1246 = vld [vmem:[#allocation3] sm:$0xff]
          %v1247 = vrcp.pop %v1246
          %v1248 = vmul.f32 %v1246, %v1247
          %v1249 = vsub.f32 2.0, %v1248
          %v1250 = vmul.f32 %v1247, %v1249
          %1252 = vset.pattern.permute.xlu0 0
          %1253 = vperm.xlu0 %1252, %v1250
          %v1254 = vpop.permute.xlu0 %1253
          %v1256 = vmul.f32 %v1245, %v1254
          %1257 = vset.pattern.permute.xlu0 1
          %1258 = vperm.xlu0 %1257, %v1250
          %v1259 = vpop.permute.xlu0 %1258
          %v1261 = vmul.f32 %v1245, %v1259
          %1262 = vset.pattern.permute.xlu0 2
          %1263 = vperm.xlu0 %1262, %v1250
          %v1264 = vpop.permute.xlu0 %1263
          %v1266 = vmul.f32 %v1245, %v1264
          %1267 = vset.pattern.permute.xlu0 3
          %1268 = vperm.xlu0 %1267, %v1250
          %v1269 = vpop.permute.xlu0 %1268
          %v1271 = vmul.f32 %v1245, %v1269
          %vm1272 = vcmask 261120
          %v1273 = vsel %vm1272, %v1256, %v1261
          %vm1274 = vcmask 523264
          %v1275 = vsel %vm1274, %v1273, %v1266
          %vm1276 = vcmask 785408
          %v1277 = vsel %vm1276, %v1275, %v1271
          %1278 = vst [vmem:[%s426] sm:$0xff] %v1277
        $region60: #{tpu_custom_call.1} parent=35 // pred_fallthru
          _
        %s1279 = sand.u32 %s217, 1
        %s1280 = scalar_lea.sflag [#allocation10], %s1279
        %s1281 = sand.u32 %s217, 1
        %s1282 = smul.addr %s1281, 8
        %s1283 = scalar_lea.vmem [#allocation14], %s1282
        // Predicated region
        $region61: #{tpu_custom_call.1} parent=35 // pred_check
          %p1284 = pneg %p227
        $region62: #{tpu_custom_call.1} parent=35 // pred_check_branch
          %1286 = sbr.rel (%p1284) target = $region64
        $region63: #{tpu_custom_call.1} parent=35 // pred_region
          %s1288 = ssub.s32 128, 128
          %1289 = vsyncadd %s1280, %s1288
          %s1290 = sadd.s32 %s34, %s33
          %s1291 = smul.addr %s1290, 128
          %s1292 = scalar_lea.hbm %s6, %s1291
          %s1294 = sshll.u32 %s1283, 4
          %s1295 = int_to_ptr.vmem [resolvable:$true] %s1294
          %1297 = dma.vmem_to_hbm [thread:$0]  %s1295, 128, %s1292, %s1280
        $region64: #{tpu_custom_call.1} parent=35 // pred_fallthru
          _
      $region36: #{tpu_custom_call.1} parent=5 // pred_fallthru
        _
      %p1298 = scmp.le.s32.totalorder 2, %s23
      // Predicated region
      $region65: #{tpu_custom_call.1} parent=5 // pred_check
        %p1299 = pneg %p1298
      $region66: #{tpu_custom_call.1} parent=5 // pred_check_branch
        %1301 = sbr.rel (%p1299) target = $region68
      $region67: #{tpu_custom_call.1} parent=5 // pred_region
        %s1302 = ssub.s32 %s23, 2
        // Predicated region
        $region69: #{tpu_custom_call.1} parent=67 // pred_check
          %p1303 = pneg %p233
        $region70: #{tpu_custom_call.1} parent=67 // pred_check_branch
          %1305 = sbr.rel (%p1303) target = $region72
        $region71: #{tpu_custom_call.1} parent=67 // pred_region
          %s1306 = sand.u32 %s218, 1
          %s1307 = scalar_lea.sflag [#allocation10], %s1306
          %s1308 = sand.u32 %s218, 1
          %s1309 = smul.addr %s1308, 8
          %s1310 = scalar_lea.vmem [#allocation14], %s1309
          %1311 = dma.done %s1307, 128
        $region72: #{tpu_custom_call.1} parent=67 // pred_fallthru
          _
      $region68: #{tpu_custom_call.1} parent=5 // pred_fallthru
        _
    $region6: #{tpu_custom_call.1} parent=1 // loop_footer
      %s27 = sadd.s32 1, %s23
    $region7: #{tpu_custom_call.1} parent=1 // loop_footer_branch
      %22 = sbr.rel target = $region3
    $region8: #{tpu_custom_call.1} parent=1 // loop_exit
      _
    %1312 = vsyncpa [#allocation9], 1
    %s1313 = scalar_lea.sflag [#allocation9], 1
    %1314 = vsyncpa %s1313, 1
    %1315 = vsyncpa [#allocation12], 1
    %s1316 = scalar_lea.sflag [#allocation12], 1
    %1317 = vsyncpa %s1316, 1
    %1318 = vsyncpa [#allocation10], 1
    %s1319 = scalar_lea.sflag [#allocation10], 1
    %1320 = vsyncpa %s1319, 1

</llo_original>
